<compile_context>
chip_gen: v7x
topology: tpu7x:2x2x1
jax: 0.10.0
libtpu: 0.0.40
codegen_flags: <defaults>
</compile_context>

<pallas_src>
import functools

import jax
import jax.numpy as jnp
import numpy as np
from jax.experimental import pallas as pl
from jax.experimental.pallas import tpu as pltpu

F32 = jnp.float32
BF16 = jnp.bfloat16

# Scaled-down hyper-parameters (structure identical to the reference).
BASE = 64        # reference: 320
HEADS = 2        # reference: 8
D_CONTEXT = 64   # reference CrossAttention context dim (SD uses 768)
NUM_GROUPS = 32  # GroupNorm(32, C) everywhere, as in the reference


# --------------------------------------------------------------------------
# Constant helpers (numpy -> baked constants, cached per shape)
# --------------------------------------------------------------------------
@functools.lru_cache(maxsize=None)
def _conv_masks(h, w, kh, kw):
    """(kh*kw, H*W, 1) f32 validity masks for zero-padded conv taps."""
    ph, pw = (kh - 1) // 2, (kw - 1) // 2
    r = np.arange(h * w)
    y, x = r // w, r % w
    masks = []
    for dy in range(kh):
        for dx in range(kw):
            oy, ox = dy - ph, dx - pw
            m = ((y + oy >= 0) & (y + oy < h) & (x + ox >= 0) & (x + ox < w))
            masks.append(m.astype(np.float32))
    return jnp.asarray(np.stack(masks)[:, :, None])


@functools.lru_cache(maxsize=None)
def _group_map(c, groups):
    """(C, G) one-hot group-membership matrix (single matrix, used both ways)."""
    ids = np.arange(c) // (c // groups)
    a = (ids[:, None] == np.arange(groups)[None, :]).astype(np.float32)
    return jnp.asarray(a)


def _gn_apply(x, a, gamma, beta, inv_count, eps, apply_silu):
    """GroupNorm (+ optional SiLU) on x:(HW, C), stats in f32."""
    # TODO(synk): the (1,C)@(C,G) group reduce is a degenerate MXU op; a
    # lane-segment reduce would be cheaper but is riskier to lower for C/G<8.
    contract_t = (((1,), (1,)), ((), ()))
    ch_sum = jnp.sum(x, axis=0, keepdims=True)          # (1, C)
    ch_sq = jnp.sum(x * x, axis=0, keepdims=True)       # (1, C)
    g_sum = jnp.dot(ch_sum, a, preferred_element_type=jnp.float32)   # (1, G)
    g_sq = jnp.dot(ch_sq, a, preferred_element_type=jnp.float32)     # (1, G)
    mean_g = g_sum * inv_count
    var_g = g_sq * inv_count - mean_g * mean_g           # biased var (torch GN)
    rstd_g = jax.lax.rsqrt(var_g + eps)
    mean_c = jax.lax.dot_general(mean_g, a, contract_t,
                                 preferred_element_type=jnp.float32)  # (1, C)
    rstd_c = jax.lax.dot_general(rstd_g, a, contract_t,
                                 preferred_element_type=jnp.float32)  # (1, C)
    y = (x - mean_c) * rstd_c * gamma + beta
    if apply_silu:
        y = y * jax.nn.sigmoid(y)
    return y


def _layer_norm(x, gamma, beta, eps=1e-5):
    mu = jnp.mean(x, axis=-1, keepdims=True)
    xc = x - mu
    var = jnp.mean(xc * xc, axis=-1, keepdims=True)
    return xc * jax.lax.rsqrt(var + eps) * gamma + beta


# --------------------------------------------------------------------------
# Direct 3x3 conv kernel: GN(+SiLU) -> patch build in VMEM (no HBM im2col)
# -> ONE K=9*Cin matmul -> bias (+ fused time add) (+ residual).
# --------------------------------------------------------------------------
def _conv_kernel(*refs, hh, ww, kh, kw, has_gn, gn_silu, has_res, inv_count, eps):
    refs = list(refs)
    x_ref = refs.pop(0)
    m_ref = refs.pop(0)
    w_ref = refs.pop(0)                     # (kh*kw*Cin, Cout) bf16
    b_ref = refs.pop(0)
    if has_gn:
        gg_ref = refs.pop(0)
        gb_ref = refs.pop(0)
        ga_ref = refs.pop(0)
    res_ref = refs.pop(0) if has_res else None
    o_ref = refs.pop(0)
    patch_ref = refs.pop(0)                 # VMEM scratch (HW, kh*kw*Cin) bf16

    x = x_ref[0].astype(jnp.float32)        # (HW, Cin)
    if has_gn:
        x = _gn_apply(x, ga_ref[...], gg_ref[...], gb_ref[...],
                      inv_count, eps, gn_silu)

    cin = x.shape[-1]
    hw = hh * ww
    ph, pw = (kh - 1) // 2, (kw - 1) // 2
    for dy in range(kh):
        for dx in range(kw):
            t = dy * kw + dx
            shift = (-((dy - ph) * ww + (dx - pw))) % hw
            xs = x if shift == 0 else pltpu.roll(x, shift=shift, axis=0)
            # TODO(synk): on v6e/v7x this mask multiply could be done in bf16.
            patch_ref[:, t * cin:(t + 1) * cin] = (xs * m_ref[t]).astype(BF16)

    y = jnp.dot(patch_ref[...], w_ref[...],
                preferred_element_type=jnp.float32)
    y = y + b_ref[...]
    if has_res:
        y = y + res_ref[0].astype(jnp.float32)
    o_ref[0] = y.astype(o_ref.dtype)


def conv3x3(x, h, w, wmat, b, *, gn=None, gn_silu=True, residual=None,
            stride=1, num_groups=NUM_GROUPS, eps=1e-5):
    """x: (N, H*W, Cin) bf16/f32, wmat: (9*Cin, Cout) bf16, b: (Cout,) or (1, Cout)."""
    n, hw, cin = x.shape
    assert hw == h * w
    kcin, cout = wmat.shape
    ktaps = kcin // cin
    kh = kw = int(round(ktaps ** 0.5))
    masks = _conv_masks(h, w, kh, kw)

    args = [x, masks, wmat, jnp.asarray(b, F32).reshape(1, cout)]
    in_specs = [pl.BlockSpec((1, hw, cin), lambda i: (i, 0, 0)),
                pl.BlockSpec((ktaps, hw, 1), lambda i: (0, 0, 0)),
                pl.BlockSpec((kcin, cout), lambda i: (0, 0)),
                pl.BlockSpec((1, cout), lambda i: (0, 0))]
    inv_count = 0.0
    if gn is not None:
        inv_count = 1.0 / float((cin // num_groups) * hw)
        args += [gn["gamma"].reshape(1, cin).astype(F32),
                 gn["beta"].reshape(1, cin).astype(F32),
                 _group_map(cin, num_groups)]
        in_specs += [pl.BlockSpec((1, cin), lambda i: (0, 0)),
                     pl.BlockSpec((1, cin), lambda i: (0, 0)),
                     pl.BlockSpec((cin, num_groups), lambda i: (0, 0))]
    if residual is not None:
        args.append(residual)
        in_specs.append(pl.BlockSpec((1, hw, cout), lambda i: (i, 0, 0)))

    # TODO(synk): grid is (batch,) = (1,) in the demo; at real SD scale tile
    # HW (with halo) / Cout so v7x's second TensorCore gets a parallel axis
    # and the whole-image block stays under the 64 MiB VMEM limit.
    out = pl.pallas_call(
        functools.partial(_conv_kernel, hh=h, ww=w, kh=kh, kw=kw,
                          has_gn=gn is not None, gn_silu=gn_silu,
                          has_res=residual is not None,
                          inv_count=inv_count, eps=eps),
        grid=(n,),
        in_specs=in_specs,
        out_specs=pl.BlockSpec((1, hw, cout), lambda i: (i, 0, 0)),
        out_shape=jax.ShapeDtypeStruct((n, hw, cout), BF16),
        scratch_shapes=[pltpu.VMEM((hw, kcin), BF16)],
        compiler_params=pltpu.CompilerParams(dimension_semantics=("parallel",)),
    )(*args)

    if stride > 1:
        # TODO(synk): stride handled by subsampling the stride-1 result (same
        # semantics for kernel=3, padding=1); 4x wasted MXU work on 3 small calls.
        out = out.reshape(n, h, w, cout)[:, ::stride, ::stride, :]
        out = out.reshape(n, (h // stride) * (w // stride), cout)
    return out


# --------------------------------------------------------------------------
# Attention kernel: LayerNorm + QKV / q / kv projections + multi-head attention
# + head concat (VMEM scratch) + out-proj + bias + residual, all in one call.
# --------------------------------------------------------------------------
def _attention_kernel(*refs, n_head, is_cross, scale):
    refs = list(refs)
    x_ref = refs.pop(0)
    ctx_ref = refs.pop(0) if is_cross else None
    lng_ref = refs.pop(0)
    lnb_ref = refs.pop(0)
    win_ref = refs.pop(0)                    # (C,3C) fused QKV or (C,C) q-proj
    wkv_ref = refs.pop(0) if is_cross else None
    wo_ref = refs.pop(0)
    bo_ref = refs.pop(0)
    o_ref = refs.pop(0)
    cat_ref = refs.pop(0)                    # VMEM scratch (L, C) f32

    x = x_ref[0].astype(jnp.float32)         # (L, C); also the residual
    c = x.shape[-1]
    dh = c // n_head

    xn = _layer_norm(x, lng_ref[...], lnb_ref[...]).astype(BF16)

    if is_cross:
        q = jnp.dot(xn, win_ref[...],
                    preferred_element_type=jnp.float32).astype(BF16)
        kv = jnp.dot(ctx_ref[0].astype(BF16), wkv_ref[...],
                     preferred_element_type=jnp.float32)
        k = kv[:, :c].astype(BF16)
        v = kv[:, c:].astype(BF16)
    else:
        qkv = jnp.dot(xn, win_ref[...], preferred_element_type=jnp.float32)
        q = qkv[:, :c].astype(BF16)
        k = qkv[:, c:2 * c].astype(BF16)
        v = qkv[:, 2 * c:].astype(BF16)

    # TODO(synk): full (Lq,Lk) scores fit easily at demo scale; use flash-style
    # KV tiling before scaling L to real SD resolutions (v7x VMEM = 64 MiB).
    for hh in range(n_head):
        sl = slice(hh * dh, (hh + 1) * dh)
        s = jax.lax.dot_general(q[:, sl], k[:, sl], (((1,), (1,)), ((), ())),
                                preferred_element_type=jnp.float32) * scale
        s = s - jnp.max(s, axis=-1, keepdims=True)
        p = jnp.exp(s)
        p = p * pl.reciprocal(jnp.sum(p, axis=-1, keepdims=True), approx=True)
        cat_ref[:, sl] = jnp.dot(p.astype(BF16), v[:, sl],
                                 preferred_element_type=jnp.float32)

    y = jnp.dot(cat_ref[...].astype(BF16), wo_ref[...],
                preferred_element_type=jnp.float32)
    y = y + bo_ref[...] + x                  # out-proj bias + residual (input)
    o_ref[0] = y.astype(o_ref.dtype)


def attention_block(x, p_attn, ln, n_head, context=None):
    """x: (N, L, C).  context: None (self) or (N, Lk, Dctx) (cross)."""
    n, l, c = x.shape
    is_cross = context is not None
    scale = float(c // n_head) ** -0.5

    args = [x]
    in_specs = [pl.BlockSpec((1, l, c), lambda i: (i, 0, 0))]
    if is_cross:
        lk, dctx = context.shape[1], context.shape[2]
        args.append(context)
        in_specs.append(pl.BlockSpec((1, lk, dctx), lambda i: (i, 0, 0)))
    args += [ln["gamma"].reshape(1, c).astype(F32),
             ln["beta"].reshape(1, c).astype(F32)]
    in_specs += [pl.BlockSpec((1, c), lambda i: (0, 0)),
                 pl.BlockSpec((1, c), lambda i: (0, 0))]
    if is_cross:
        args += [p_attn["wq"], p_attn["w_kv"]]
        in_specs += [pl.BlockSpec((c, c), lambda i: (0, 0)),
                     pl.BlockSpec((context.shape[2], 2 * c), lambda i: (0, 0))]
    else:
        args.append(p_attn["w_qkv"])
        in_specs.append(pl.BlockSpec((c, 3 * c), lambda i: (0, 0)))
    args += [p_attn["wo"], p_attn["bo"].reshape(1, c).astype(F32)]
    in_specs += [pl.BlockSpec((c, c), lambda i: (0, 0)),
                 pl.BlockSpec((1, c), lambda i: (0, 0))]

    return pl.pallas_call(
        functools.partial(_attention_kernel, n_head=n_head, is_cross=is_cross,
                          scale=scale),
        grid=(n,),
        in_specs=in_specs,
        out_specs=pl.BlockSpec((1, l, c), lambda i: (i, 0, 0)),
        out_shape=jax.ShapeDtypeStruct((n, l, c), BF16),
        scratch_shapes=[pltpu.VMEM((l, c), jnp.float32)],
        compiler_params=pltpu.CompilerParams(dimension_semantics=("parallel",)),
    )(*args)


# --------------------------------------------------------------------------
# GEGLU feed-forward kernel: LN + value/gate matmuls + GELU gate + second
# matmul + bias + residual, all fused (no (HW, 4C) HBM round-trip).
# --------------------------------------------------------------------------
def _ffn_kernel(x_ref, lng_ref, lnb_ref, wv_ref, bv_ref, wg_ref, bg_ref,
                w2_ref, b2_ref, o_ref):
    x = x_ref[0].astype(jnp.float32)
    xn = _layer_norm(x, lng_ref[...], lnb_ref[...]).astype(BF16)
    val = jnp.dot(xn, wv_ref[...], preferred_element_type=jnp.float32) + bv_ref[...]
    gate = jnp.dot(xn, wg_ref[...], preferred_element_type=jnp.float32) + bg_ref[...]
    # TODO(synk): torch F.gelu defaults to the exact erf form; the tanh
    # approximation is used for robust Mosaic lowering.
    hid = (val * jax.nn.gelu(gate, approximate=True)).astype(BF16)
    y = jnp.dot(hid, w2_ref[...], preferred_element_type=jnp.float32)
    y = y + b2_ref[...] + x                  # residual = input
    o_ref[0] = y.astype(o_ref.dtype)


def ffn_geglu(x, ln, g1, g2):
    n, l, c = x.shape
    c4 = g1["w_val"].shape[1]
    return pl.pallas_call(
        _ffn_kernel,
        grid=(n,),
        in_specs=[pl.BlockSpec((1, l, c), lambda i: (i, 0, 0)),
                  pl.BlockSpec((1, c), lambda i: (0, 0)),
                  pl.BlockSpec((1, c), lambda i: (0, 0)),
                  pl.BlockSpec((c, c4), lambda i: (0, 0)),
                  pl.BlockSpec((1, c4), lambda i: (0, 0)),
                  pl.BlockSpec((c, c4), lambda i: (0, 0)),
                  pl.BlockSpec((1, c4), lambda i: (0, 0)),
                  pl.BlockSpec((c4, c), lambda i: (0, 0)),
                  pl.BlockSpec((1, c), lambda i: (0, 0))],
        out_specs=pl.BlockSpec((1, l, c), lambda i: (i, 0, 0)),
        out_shape=jax.ShapeDtypeStruct((n, l, c), BF16),
        compiler_params=pltpu.CompilerParams(dimension_semantics=("parallel",)),
    )(x, ln["gamma"].reshape(1, c).astype(F32), ln["beta"].reshape(1, c).astype(F32),
      g1["w_val"], g1["b_val"].reshape(1, c4),
      g1["w_gate"], g1["b_gate"].reshape(1, c4),
      g2["w"], g2["b"].reshape(1, c))


# --------------------------------------------------------------------------
# Simple full-block linear kernel (1x1 residual projection only).
# --------------------------------------------------------------------------
def _linear_kernel(x_ref, w_ref, b_ref, o_ref):
    y = jnp.dot(x_ref[...].astype(BF16), w_ref[...],
                preferred_element_type=jnp.float32) + b_ref[...]
    o_ref[...] = y.astype(o_ref.dtype)


def linear(x2d, w, b, out_dtype=BF16):
    m = x2d.shape[0]
    nd = w.shape[1]
    return pl.pallas_call(
        _linear_kernel,
        out_shape=jax.ShapeDtypeStruct((m, nd), out_dtype),
    )(x2d, w, jnp.asarray(b, F32).reshape(1, nd))


# --------------------------------------------------------------------------
# Output layer kernel: GroupNorm + SiLU + 1x1 conv fused.
# --------------------------------------------------------------------------
def _output_kernel(x_ref, a_ref, g_ref, b_ref, w_ref, cb_ref, o_ref, *,
                   inv_count, eps):
    x = x_ref[0].astype(jnp.float32)
    y = _gn_apply(x, a_ref[...], g_ref[...], b_ref[...], inv_count, eps, True)
    o = jnp.dot(y.astype(BF16), w_ref[...], preferred_element_type=jnp.float32)
    o_ref[0] = (o + cb_ref[...]).astype(o_ref.dtype)


def output_layer_forward(p, x, *, num_groups=NUM_GROUPS, eps=1e-5):
    n, hw, c = x.shape
    cout = p["conv"]["w"].shape[1]
    inv_count = 1.0 / float((c // num_groups) * hw)
    return pl.pallas_call(
        functools.partial(_output_kernel, inv_count=inv_count, eps=eps),
        grid=(n,),
        in_specs=[pl.BlockSpec((1, hw, c), lambda i: (i, 0, 0)),
                  pl.BlockSpec((c, num_groups), lambda i: (0, 0)),
                  pl.BlockSpec((1, c), lambda i: (0, 0)),
                  pl.BlockSpec((1, c), lambda i: (0, 0)),
                  pl.BlockSpec((c, cout), lambda i: (0, 0)),
                  pl.BlockSpec((1, cout), lambda i: (0, 0))],
        out_specs=pl.BlockSpec((1, hw, cout), lambda i: (i, 0, 0)),
        out_shape=jax.ShapeDtypeStruct((n, hw, cout), F32),
        compiler_params=pltpu.CompilerParams(dimension_semantics=("parallel",)),
    )(x, _group_map(c, num_groups),
      p["gn"]["gamma"].reshape(1, c).astype(F32),
      p["gn"]["beta"].reshape(1, c).astype(F32),
      p["conv"]["w"], p["conv"]["b"].reshape(1, cout).astype(F32))


# --------------------------------------------------------------------------
# Time kernel: TimeEmbedding MLP + silu + ALL resblock linear_time projections
# (weights stacked along N) in a single call.
# --------------------------------------------------------------------------
def _time_kernel(t_ref, w1_ref, b1_ref, w2_ref, b2_ref, wt_ref, bt_ref, o_ref):
    t = t_ref[...].astype(BF16)
    h = jnp.dot(t, w1_ref[...], preferred_element_type=jnp.float32) + b1_ref[...]
    h = h * jax.nn.sigmoid(h)                              # F.silu
    e = jnp.dot(h.astype(BF16), w2_ref[...],
                preferred_element_type=jnp.float32) + b2_ref[...]
    e = e * jax.nn.sigmoid(e)                              # silu(time) in each resblock
    o = jnp.dot(e.astype(BF16), wt_ref[...],
                preferred_element_type=jnp.float32) + bt_ref[...]
    o_ref[...] = o


def time_forward(te, tt, t):
    total = tt["w"].shape[1]
    n4 = te["l1"]["w"].shape[1]
    ne = te["l2"]["w"].shape[1]
    return pl.pallas_call(
        _time_kernel,
        out_shape=jax.ShapeDtypeStruct((1, total), F32),
    )(t, te["l1"]["w"], te["l1"]["b"].reshape(1, n4),
      te["l2"]["w"], te["l2"]["b"].reshape(1, ne),
      tt["w"], tt["b"])


# --------------------------------------------------------------------------
# Plain-JAX glue: up-sampling
# --------------------------------------------------------------------------
def upsample2x(x, h, w):
    # TODO(synk): could be folded into the following conv's roll/mask tables to
    # avoid one extra HBM round trip at the decoder's largest resolutions.
    n, hw, c = x.shape
    x4 = x.reshape(n, h, w, c)
    x4 = jnp.repeat(jnp.repeat(x4, 2, axis=1), 2, axis=2)
    return x4.reshape(n, 4 * hw, c), 2 * h, 2 * w


# --------------------------------------------------------------------------
# Parameter initialization (deterministic, synthetic; weights stored in bf16)
# --------------------------------------------------------------------------
class KeyGen:
    def __init__(self, seed):
        self._key = jax.random.PRNGKey(seed)

    def __call__(self):
        self._key, sub = jax.random.split(self._key)
        return sub


class TimeTable:
    """Collects every ResidualBlock's linear_time projection so that all of
    them run as a single fused matmul (kills dozens of M=1 pallas calls)."""

    def __init__(self, kg, n_embd):
        self.kg, self.n_embd = kg, n_embd
        self.ws, self.bs, self.total = [], [], 0

    def register(self, cout):
        off = self.total
        self.ws.append((jax.random.normal(self.kg(), (self.n_embd, cout), F32)
                        / (self.n_embd ** 0.5)).astype(BF16))
        self.bs.append(jnp.zeros((cout,), F32))
        self.total += cout
        return off

    def finalize(self):
        return {"w": jnp.concatenate(self.ws, axis=1),
                "b": jnp.concatenate(self.bs).reshape(1, self.total)}


def init_linear(kg, d_in, d_out, bias=True):
    w = (jax.random.normal(kg(), (d_in, d_out), F32) / (d_in ** 0.5)).astype(BF16)
    return {"w": w, "b": jnp.zeros((d_out,), F32) if bias else None}


def init_conv3(kg, cin, cout):
    fan_in = 9 * cin
    w = (jax.random.normal(kg(), (9 * cin, cout), F32) / (fan_in ** 0.5)).astype(BF16)
    return {"w": w, "b": jnp.zeros((cout,), F32)}


def init_conv1(kg, cin, cout):
    w = (jax.random.normal(kg(), (cin, cout), F32) / (cin ** 0.5)).astype(BF16)
    return {"w": w, "b": jnp.zeros((cout,), F32)}


def init_norm(c):
    return {"gamma": jnp.ones((c,), F32), "beta": jnp.zeros((c,), F32)}


def init_time_embedding(kg, n_embd):
    return {"l1": init_linear(kg, n_embd, 4 * n_embd),
            "l2": init_linear(kg, 4 * n_embd, n_embd)}


def init_resblock(kg, tt, cin, cout):
    return {
        "gn1": init_norm(cin),
        "conv_feature": init_conv3(kg, cin, cout),
        # TODO(synk): reference uses n_time=1200 which mismatches the TimeEmbedding
        # output width; the intended n_time = time-embedding width is used.
        "t_off": tt.register(cout),
        "cout": cout,
        "gn2": init_norm(cout),
        "conv_merge": init_conv3(kg, cout, cout),
        # TODO(synk): reference inverts the Identity/Conv1x1 condition and returns
        # `merge + self.reiduallayer` (tensor + Module); the intended residual
        # projection path is implemented.
        "res_conv": None if cin == cout else init_conv1(kg, cin, cout),
    }


def init_attnblock(kg, n_head, n_embd, d_context):
    c = n_head * n_embd
    # TODO(synk): self_attention / CrossAttention classes are not in the reference
    # file; standard SD attention (no in_proj bias, out_proj bias) is assumed.
    wq = init_linear(kg, c, c, bias=False)["w"]
    wk = init_linear(kg, c, c, bias=False)["w"]
    wv = init_linear(kg, c, c, bias=False)["w"]
    cq = init_linear(kg, c, c, bias=False)["w"]
    ck = init_linear(kg, d_context, c, bias=False)["w"]
    cv = init_linear(kg, d_context, c, bias=False)["w"]
    return {
        "n_head": n_head,
        "gn": init_norm(c),
        "conv_input": init_conv3(kg, c, c),
        "ln1": init_norm(c),
        "self_attn": {"w_qkv": jnp.concatenate([wq, wk, wv], axis=1),
                      "wo": init_linear(kg, c, c)["w"],
                      "bo": jnp.zeros((c,), F32)},
        "ln2": init_norm(c),
        "cross_attn": {"wq": cq,
                       "w_kv": jnp.concatenate([ck, cv], axis=1),
                       "wo": init_linear(kg, c, c)["w"],
                       "bo": jnp.zeros((c,), F32)},
        "ln3": init_norm(c),
        "geglu1": {"w_val": init_linear(kg, c, 4 * c)["w"],
                   "w_gate": init_linear(kg, c, 4 * c)["w"],
                   "b_val": jnp.zeros((4 * c,), F32),
                   "b_gate": jnp.zeros((4 * c,), F32)},
        "geglu2": init_linear(kg, 4 * c, c),
        "conv_output": init_conv3(kg, c, c),
    }


def build_diffusion_params(kg, base=BASE, heads=HEADS, d_context=D_CONTEXT):
    c1, c2, c3 = base, 2 * base, 4 * base
    tt = TimeTable(kg, base)

    def res(cin, cout):
        return ("res", init_resblock(kg, tt, cin, cout))

    def attn(c):
        return ("attn", init_attnblock(kg, heads, c // heads, d_context))

    def conv(cin, cout, stride):
        p = init_conv3(kg, cin, cout)
        p["stride"] = stride
        return ("conv", p)

    def up(c):
        return ("up", init_conv3(kg, c, c))

    encoders = [
        [conv(4, c1, 1)],
        [res(c1, c1), attn(c1)],
        [res(c1, c1), attn(c1)],
        [conv(c1, c1, 2)],
        [res(c1, c2), attn(c2)],
        [res(c2, c2), attn(c2)],
        [conv(c2, c2, 2)],
        [res(c2, c3), attn(c3)],
        [res(c3, c3), attn(c3)],
        [conv(c3, c3, 2)],
        [res(c3, c3)],
        [res(c3, c3)],
    ]
    bottleneck = [res(c3, c3), attn(c3), res(c3, c3)]
    decoders = [
        [res(2 * c3, c3)],
        [res(2 * c3, c3)],
        [res(2 * c3, c3), up(c3)],
        [res(2 * c3, c3), attn(c3)],
        [res(2 * c3, c3), attn(c3)],
        [res(c3 + c2, c3), attn(c3), up(c3)],
        [res(c3 + c2, c2), attn(c2)],
        [res(2 * c2, c2), attn(c2)],
        [res(c2 + c1, c2), attn(c2), up(c2)],
        [res(c2 + c1, c1), attn(c1)],
        [res(2 * c1, c1), attn(c1)],
        [res(2 * c1, c1), attn(c1)],
    ]
    return {
        "time_embedding": init_time_embedding(kg, base),
        "time_table": tt.finalize(),
        "unet": {"encoders": encoders, "bottleneck": bottleneck, "decoders": decoders},
        "final": {"gn": init_norm(c1), "conv": init_conv1(kg, c1, 4)},
    }


# --------------------------------------------------------------------------
# Module forwards
# --------------------------------------------------------------------------
def resblock_forward(p, x, h, w, all_t):
    # TODO(synk): reference forward has swapped (time, feture) args and the
    # `unqwuueze` typo; the intended semantics are implemented here.
    n, hw, cin = x.shape
    off, cout = p["t_off"], p["cout"]
    t = all_t[:, off:off + cout]                      # silu + linear_time already applied
    # TODO(synk): time broadcast-add folded into the conv bias (only exact for batch==1).
    b_eff = p["conv_feature"]["b"].reshape(1, cout) + t
    hfeat = conv3x3(x, h, w, p["conv_feature"]["w"], b_eff,
                    gn=p["gn1"], gn_silu=True)
    if p["res_conv"] is None:
        skip = x
    else:
        skip = linear(x.reshape(n * hw, cin), p["res_conv"]["w"],
                      p["res_conv"]["b"]).reshape(n, hw, -1)
    return conv3x3(hfeat, h, w, p["conv_merge"]["w"], p["conv_merge"]["b"],
                   gn=p["gn2"], gn_silu=True, residual=skip)


def attnblock_forward(p, x, h, w, context):
    residue_long = x
    # GroupNorm (no silu) fused into conv_input
    y = conv3x3(x, h, w, p["conv_input"]["w"], p["conv_input"]["b"],
                gn=p["gn"], gn_silu=False)
    # self-attention (LN + QKV proj + attention + out-proj + residual fused)
    y = attention_block(y, p["self_attn"], p["ln1"], p["n_head"])
    # cross-attention (LN + q/kv proj + attention + out-proj + residual fused)
    y = attention_block(y, p["cross_attn"], p["ln2"], p["n_head"], context=context)
    # GEGLU feed-forward (LN + both matmuls + gate + residual fused)
    y = ffn_geglu(y, p["ln3"], p["geglu1"], p["geglu2"])
    # output conv with the long residual fused
    return conv3x3(y, h, w, p["conv_output"]["w"], p["conv_output"]["b"],
                   residual=residue_long)


def switch_sequential(layers, x, h, w, context, all_t):
    for kind, p in layers:
        if kind == "res":
            x = resblock_forward(p, x, h, w, all_t)
        elif kind == "attn":
            x = attnblock_forward(p, x, h, w, context)
        elif kind == "conv":
            x = conv3x3(x, h, w, p["w"], p["b"], stride=p["stride"])
            h //= p["stride"]
            w //= p["stride"]
        elif kind == "up":
            x, h, w = upsample2x(x, h, w)
            x = conv3x3(x, h, w, p["w"], p["b"])
    return x, h, w


def unet_forward(p, x, h, w, context, all_t):
    skips = []
    for layers in p["encoders"]:
        x, h, w = switch_sequential(layers, x, h, w, context, all_t)
        skips.append(x)
    x, h, w = switch_sequential(p["bottleneck"], x, h, w, context, all_t)
    for layers in p["decoders"]:
        x = jnp.concatenate([x, skips.pop()], axis=-1)    # channel concat
        x, h, w = switch_sequential(layers, x, h, w, context, all_t)
    return x, h, w


def diffusion_forward(params, latent_nchw, context, time):
    n, cin, h, w = latent_nchw.shape
    # TimeEmbedding + every resblock's linear_time in ONE kernel.
    all_t = time_forward(params["time_embedding"], params["time_table"], time)
    x = jnp.transpose(latent_nchw, (0, 2, 3, 1)).reshape(n, h * w, cin)
    context = context.astype(BF16)
    x, h, w = unet_forward(params["unet"], x, h, w, context, all_t)
    x = output_layer_forward(params["final"], x)                     # (n, h*w, 4) f32
    x = x.reshape(n, h, w, -1)
    return jnp.transpose(x, (0, 3, 1, 2))                            # NHWC -> NCHW


# --------------------------------------------------------------------------
if __name__ == "__main__":
    kg = KeyGen(0)
    params = build_diffusion_params(kg)

    key = jax.random.PRNGKey(0)
    k1, k2, k3 = jax.random.split(key, 3)
    latent = jax.random.normal(k1, (1, 4, 16, 16), F32)       # NCHW latent
    context = jax.random.normal(k2, (1, 8, D_CONTEXT), F32)   # (batch, seq, d_ctx)
    time = jax.random.normal(k3, (1, BASE), F32)              # time embedding input

    out = diffusion_forward(params, latent, context, time)
    out = jax.block_until_ready(out)
    assert out.shape == (1, 4, 16, 16), out.shape
    assert bool(jnp.all(jnp.isfinite(out)))
    print("KERNEL_OK")
</pallas_src>

<mosaic_0001>
module attributes {stable_mosaic.version = 11 : i64} {
  func.func @_time_kernel(%arg0: memref<1x64xf32, #tpu.memory_space<vmem>>, %arg1: memref<64x256xbf16, #tpu.memory_space<vmem>>, %arg2: memref<1x256xf32, #tpu.memory_space<vmem>>, %arg3: memref<256x64xbf16, #tpu.memory_space<vmem>>, %arg4: memref<1x64xf32, #tpu.memory_space<vmem>>, %arg5: memref<64x4032xbf16, #tpu.memory_space<vmem>>, %arg6: memref<1x4032xf32, #tpu.memory_space<vmem>>, %arg7: memref<1x4032xf32, #tpu.memory_space<vmem>>) attributes {dimension_semantics = [], scalar_prefetch = 0 : i64, scratch_operands = 0 : i64, tpu.core_type = #tpu.core_type<tc>} {
    %c0 = arith.constant 0 : index
    %c0_0 = arith.constant 0 : index
    %0 = vector.load %arg0[%c0, %c0_0] : memref<1x64xf32, #tpu.memory_space<vmem>>, vector<1x64xf32>
    %1 = arith.truncf %0 : vector<1x64xf32> to vector<1x64xbf16>
    %c0_1 = arith.constant 0 : index
    %c0_2 = arith.constant 0 : index
    %2 = vector.load %arg1[%c0_1, %c0_2] : memref<64x256xbf16, #tpu.memory_space<vmem>>, vector<64x256xbf16>
    %cst = arith.constant dense<0.000000e+00> : vector<1x256xf32>
    %3 = tpu.matmul %1, %2, %cst {dimension_numbers = #tpu.dot_dimension_numbers<[1], [0], [0], [1], [0, 0, 1, 1], [], []>} : vector<1x64xbf16>, vector<64x256xbf16>, vector<1x256xf32> -> vector<1x256xf32>
    %c0_3 = arith.constant 0 : index
    %c0_4 = arith.constant 0 : index
    %4 = vector.load %arg2[%c0_3, %c0_4] : memref<1x256xf32, #tpu.memory_space<vmem>>, vector<1x256xf32>
    %5 = arith.addf %3, %4 : vector<1x256xf32>
    %6 = arith.negf %5 : vector<1x256xf32>
    %7 = math.exp %6 : vector<1x256xf32>
    %cst_5 = arith.constant 1.000000e+00 : f32
    %8 = vector.broadcast %cst_5 : f32 to vector<1x256xf32>
    %9 = arith.addf %8, %7 : vector<1x256xf32>
    %10 = arith.divf %8, %9 : vector<1x256xf32>
    %11 = arith.mulf %5, %10 : vector<1x256xf32>
    %12 = arith.truncf %11 : vector<1x256xf32> to vector<1x256xbf16>
    %c0_6 = arith.constant 0 : index
    %c0_7 = arith.constant 0 : index
    %13 = vector.load %arg3[%c0_6, %c0_7] : memref<256x64xbf16, #tpu.memory_space<vmem>>, vector<256x64xbf16>
    %cst_8 = arith.constant dense<0.000000e+00> : vector<1x64xf32>
    %14 = tpu.matmul %12, %13, %cst_8 {dimension_numbers = #tpu.dot_dimension_numbers<[1], [0], [0], [1], [0, 0, 1, 1], [], []>} : vector<1x256xbf16>, vector<256x64xbf16>, vector<1x64xf32> -> vector<1x64xf32>
    %c0_9 = arith.constant 0 : index
    %c0_10 = arith.constant 0 : index
    %15 = vector.load %arg4[%c0_9, %c0_10] : memref<1x64xf32, #tpu.memory_space<vmem>>, vector<1x64xf32>
    %16 = arith.addf %14, %15 : vector<1x64xf32>
    %17 = arith.negf %16 : vector<1x64xf32>
    %18 = math.exp %17 : vector<1x64xf32>
    %cst_11 = arith.constant 1.000000e+00 : f32
    %19 = vector.broadcast %cst_11 : f32 to vector<1x64xf32>
    %20 = arith.addf %19, %18 : vector<1x64xf32>
    %21 = arith.divf %19, %20 : vector<1x64xf32>
    %22 = arith.mulf %16, %21 : vector<1x64xf32>
    %23 = arith.truncf %22 : vector<1x64xf32> to vector<1x64xbf16>
    %c0_12 = arith.constant 0 : index
    %c0_13 = arith.constant 0 : index
    %24 = vector.load %arg5[%c0_12, %c0_13] : memref<64x4032xbf16, #tpu.memory_space<vmem>>, vector<64x4032xbf16>
    %cst_14 = arith.constant dense<0.000000e+00> : vector<1x4032xf32>
    %25 = tpu.matmul %23, %24, %cst_14 {dimension_numbers = #tpu.dot_dimension_numbers<[1], [0], [0], [1], [0, 0, 1, 1], [], []>} : vector<1x64xbf16>, vector<64x4032xbf16>, vector<1x4032xf32> -> vector<1x4032xf32>
    %c0_15 = arith.constant 0 : index
    %c0_16 = arith.constant 0 : index
    %26 = vector.load %arg6[%c0_15, %c0_16] : memref<1x4032xf32, #tpu.memory_space<vmem>>, vector<1x4032xf32>
    %27 = arith.addf %25, %26 : vector<1x4032xf32>
    %c0_17 = arith.constant 0 : index
    %c0_18 = arith.constant 0 : index
    %28 = vector.load %arg7[%c0_17, %c0_18] : memref<1x4032xf32, #tpu.memory_space<vmem>>, vector<1x4032xf32>
    tpu.vector_store %arg7[%c0_17, %c0_18], %27 {strides = array<i32>} : memref<1x4032xf32, #tpu.memory_space<vmem>>, vector<1x4032xf32>,
    return
  }
}

</mosaic_0001>

<llo_original>
// kernel: tpu_custom_call.1
$region0: #{tpu_custom_call.1}
  #allocation0 [shape = 'u32[]', space=smem, size = 0x4, offset = 0x4, fixed_abs, tag = 'smem constant byte address 0x4 - core index']
  #allocation1 [shape = 'u32[144,128]{1,0:T(1,128)}', space=vmem, size = 0x12000, scoped, tag = 'internal scratch']
  %s0 = inlined_call_operand.vmem [shape: f32[1,64], index: 0, kind: input, shape index: {}]
  %s1 = inlined_call_operand.vmem [shape: bf16[64,256], index: 1, kind: input, shape index: {}]
  %s2 = inlined_call_operand.vmem [shape: f32[1,256], index: 2, kind: input, shape index: {}]
  %s3 = inlined_call_operand.vmem [shape: bf16[256,64], index: 3, kind: input, shape index: {}]
  %s4 = inlined_call_operand.vmem [shape: f32[1,64], index: 4, kind: input, shape index: {}]
  %s5 = inlined_call_operand.hbm [shape: bf16[64,4032], index: 5, kind: input, shape index: {}]
  %s6 = inlined_call_operand.vmem [shape: f32[1,4032], index: 6, kind: input, shape index: {}]
  %s7 = inlined_call_operand.hbm [shape: f32[1,4032], index: 7, kind: output, shape index: {}]
  %s8 = sld [smem:[#allocation0]]
  $region42: #{tpu_custom_call.1} parent=0
    _
  %s10 = ssub.s32 1, %s8
  %s11 = scalar_select 0, %s10, %s8
  $region1: #{tpu_custom_call.1} parent=0
    #allocation2 [shape = 'u8[524288]{0}', space=vmem, size = 0x80000, scoped, tag = 'input window, operand 5, single buffered']
    #allocation3 [shape = 's32[1]{0}', space=sflag, size = 0x4, scoped, tag = 'scoped memory for tpu_custom_call.1']
    #allocation4 [shape = 's32[1]{0}', space=sflag, size = 0x4, scoped, tag = 'scoped memory for tpu_custom_call.1']
    #allocation5 [shape = 'u8[16384]{0}', space=vmem, size = 0x4000, scoped, tag = 'output window, operand 0, single buffered']
    %12 = vsyncpa [#allocation3], 0
    %13 = vsyncpa [#allocation4], 0
    // Predicated region
    $region2: #{tpu_custom_call.1} parent=1 // pred_check
      _
    $region3: #{tpu_custom_call.1} parent=1 // pred_check_branch
      %15 = sbr.rel (0) target = $region5
    $region4: #{tpu_custom_call.1} parent=1 // pred_region
      _
    $region5: #{tpu_custom_call.1} parent=1 // pred_fallthru
      _
    // Predicated region
    $region6: #{tpu_custom_call.1} parent=1 // pred_check
      _
    $region7: #{tpu_custom_call.1} parent=1 // pred_check_branch
      %17 = sbr.rel (0) target = $region9
    $region8: #{tpu_custom_call.1} parent=1 // pred_region
      _
    $region9: #{tpu_custom_call.1} parent=1 // pred_fallthru
      _
    // Predicated region
    $region10: #{tpu_custom_call.1} parent=1 // pred_check
      _
    $region11: #{tpu_custom_call.1} parent=1 // pred_check_branch
      %19 = sbr.rel (0) target = $region13
    $region12: #{tpu_custom_call.1} parent=1 // pred_region
      _
    $region13: #{tpu_custom_call.1} parent=1 // pred_fallthru
      _
    // Predicated region
    $region14: #{tpu_custom_call.1} parent=1 // pred_check
      _
    $region15: #{tpu_custom_call.1} parent=1 // pred_check_branch
      %21 = sbr.rel (0) target = $region17
    $region16: #{tpu_custom_call.1} parent=1 // pred_region
      _
    $region17: #{tpu_custom_call.1} parent=1 // pred_fallthru
      _
    // Predicated region
    $region18: #{tpu_custom_call.1} parent=1 // pred_check
      _
    $region19: #{tpu_custom_call.1} parent=1 // pred_check_branch
      %23 = sbr.rel (0) target = $region21
    $region20: #{tpu_custom_call.1} parent=1 // pred_region
      _
    $region21: #{tpu_custom_call.1} parent=1 // pred_fallthru
      _
    // Predicated region
    $region22: #{tpu_custom_call.1} parent=1 // pred_check
      _
    $region23: #{tpu_custom_call.1} parent=1 // pred_check_branch
      %25 = sbr.rel (0) target = $region25
    $region24: #{tpu_custom_call.1} parent=1 // pred_region
      %s27 = ssub.s32 16384, 16384
      %28 = vsyncadd [#allocation3], %s27
      %s29 = sshll.u32 [#allocation2], 4
      %s30 = int_to_ptr.vmem [resolvable:$true] %s29
      %35 = dma.hbm_to_vmem [thread:$0]  %s5, 16384, %s30, [#allocation3], 2048, 2048, 128
    $region25: #{tpu_custom_call.1} parent=1 // pred_fallthru
      _
    // Predicated region
    $region26: #{tpu_custom_call.1} parent=1 // pred_check
      _
    $region27: #{tpu_custom_call.1} parent=1 // pred_check_branch
      %37 = sbr.rel (0) target = $region29
    $region28: #{tpu_custom_call.1} parent=1 // pred_region
      _
    $region29: #{tpu_custom_call.1} parent=1 // pred_fallthru
      _
    // Predicated region
    $region30: #{tpu_custom_call.1} parent=1 // pred_check
      _
    $region31: #{tpu_custom_call.1} parent=1 // pred_check_branch
      %39 = sbr.rel (0) target = $region33
    $region32: #{tpu_custom_call.1} parent=1 // pred_region
      %40 = dma.done [#allocation3], 16384
    $region33: #{tpu_custom_call.1} parent=1 // pred_fallthru
      _
    %v42 = vld [vmem:[%s0] sm:$0x1]
    %v43 = vpack.c.bf16 %v42, %v42
    %v44 = vld [vmem:[%s1] sm:$0xff]
    %v45 = vld [vmem:[%s1 + $0x8] sm:$0xff]
    %v46 = vld [vmem:[%s1 + $0x10] sm:$0xff]
    %v47 = vld [vmem:[%s1 + $0x18] sm:$0xff]
    %v48 = vld [vmem:[%s1 + $0x20] sm:$0xff]
    %v49 = vld [vmem:[%s1 + $0x28] sm:$0xff]
    %v50 = vld [vmem:[%s1 + $0x30] sm:$0xff]
    %v51 = vld [vmem:[%s1 + $0x38] sm:$0xff]
    %v52 = vld [vmem:[%s2] sm:$0x3]
    %v61 = vunpack.c.l.b16 %v44
    %v62 = vunpack.c.h.b16 %v44
    %v63 = vunpack.c.l.b16 %v45
    %v64 = vunpack.c.h.b16 %v45
    %v65 = vunpack.c.l.b16 %v46
    %v66 = vunpack.c.h.b16 %v46
    %v67 = vunpack.c.l.b16 %v47
    %v68 = vunpack.c.h.b16 %v47
    %v69 = vunpack.c.l.b16 %v48
    %v70 = vunpack.c.h.b16 %v48
    %v71 = vunpack.c.l.b16 %v49
    %v72 = vunpack.c.h.b16 %v49
    %v73 = vunpack.c.l.b16 %v50
    %v74 = vunpack.c.h.b16 %v50
    %v75 = vunpack.c.l.b16 %v51
    %v76 = vunpack.c.h.b16 %v51
    %v77 = vpack.c.b16 %v63, %v61
    %v78 = vpack.c.b16 %v64, %v62
    %v79 = vpack.c.b16 %v67, %v65
    %v80 = vpack.c.b16 %v68, %v66
    %v81 = vpack.c.b16 %v71, %v69
    %v82 = vpack.c.b16 %v72, %v70
    %v83 = vpack.c.b16 %v75, %v73
    %v84 = vpack.c.b16 %v76, %v74
    %v94 = vlaneseq
    %v95 = vshrl.u32 %v94, 7
    %v96 = vsub.s32 0, %v95
    %v97 = vrot.slane %v52, %v96
    %v98 = vlaneseq
    %v99 = vshrl.u32 %v98, 7
    %v100 = vsub.s32 1, %v99
    %v101 = vrot.slane %v52, %v100
    %vm104 = vcmask 523264
    %v106 = vsel %vm104, %v43, 0
    %108 = vmatprep.subr.bf16.mxu0 %v78
    %109 = vmatpush1.bf16.msra.mxu0 %v77
    %110 = vmatprep.subr.bf16.mxu0 %v80
    %111 = vmatpush1.bf16.msra.mxu0 %v79
    %112 = vmatprep.subr.bf16.mxu0 %v82
    %113 = vmatpush1.bf16.msra.mxu0 %v81
    %114 = vmatprep.subr.bf16.mxu0 %v84
    %115 = vmatpush1.bf16.msra.mxu0 %v83
    %116 = vmatprep.subr.bf16.mxu0 0
    %117 = vmatpush1.bf16.msra.mxu0 0
    %118 = vmatprep.subr.bf16.mxu0 0
    %119 = vmatpush1.bf16.msra.mxu0 0
    %120 = vmatprep.subr.bf16.mxu0 0
    %121 = vmatpush1.bf16.msra.mxu0 0
    %122 = vmatprep.subr.bf16.mxu0 0
    %123 = vmatpush1.bf16.msra.mxu0 0
    %124 = vmatprep.subr.bf16.mxu0 0
    %125 = vmatpush1.bf16.msra.mxu0 0
    %126 = vmatprep.subr.bf16.mxu0 0
    %127 = vmatpush1.bf16.msra.mxu0 0
    %128 = vmatprep.subr.bf16.mxu0 0
    %129 = vmatpush1.bf16.msra.mxu0 0
    %130 = vmatprep.subr.bf16.mxu0 0
    %131 = vmatpush1.bf16.msra.mxu0 0
    %132 = vmatprep.subr.bf16.mxu0 0
    %133 = vmatpush1.bf16.msra.mxu0 0
    %134 = vmatprep.subr.bf16.mxu0 0
    %135 = vmatpush1.bf16.msra.mxu0 0
    %136 = vmatprep.subr.bf16.mxu0 0
    %137 = vmatpush1.bf16.msra.mxu0 0
    %138 = vmatprep.subr.bf16.mxu0 0
    %139 = vmatpush1.bf16.msra.mxu0 0
    %140 = vmatprep.mubr.bf16.mxu0 0
    %141 = vmatmul.mubr.bf16.gmra.mrb[0].mxu0 %v106
    %v142 = vpop.f32.mrb[0].mxu0
    %v143 = vadd.f32 %v97, %v142
    %v144 = vpop.f32.mrb[0].mxu0
    %v145 = vadd.f32 %v101, %v144
    %v146 = vpop.f32.mrb[0].mxu0
    %v147 = vpop.f32.mrb[0].mxu0
    %148 = vdwg.mxu0
    %v149 = vxor.u32 %v143, 2147483648
    %v150 = vxor.u32 %v145, 2147483648
    %v151 = vmul.f32 %v149, 1.442695
    %v152 = vpow.pop %v151
    %v153 = vmul.f32 %v150, 1.442695
    %v154 = vpow.pop %v153
    %v155 = vadd.f32 %v152, 1.0
    %v156 = vadd.f32 %v154, 1.0
    %v157 = vrcp.pop %v155
    %v158 = vmul.f32 1.0, %v157
    %v159 = vrcp.pop %v156
    %v160 = vmul.f32 1.0, %v159
    %v161 = vmul.f32 %v143, %v158
    %v162 = vmul.f32 %v145, %v160
    %v163 = vpack.c.bf16 %v161, %v161
    %v164 = vpack.c.bf16 %v162, %v162
    %v165 = vld [vmem:[%s3] sm:$0xf]
    %v166 = vld [vmem:[%s3 + $0x4] sm:$0xf]
    %v167 = vld [vmem:[%s3 + $0x8] sm:$0xf]
    %v168 = vld [vmem:[%s3 + $0xc] sm:$0xf]
    %v169 = vld [vmem:[%s3 + $0x10] sm:$0xf]
    %v170 = vld [vmem:[%s3 + $0x14] sm:$0xf]
    %v171 = vld [vmem:[%s3 + $0x18] sm:$0xf]
    %v172 = vld [vmem:[%s3 + $0x1c] sm:$0xf]
    %v173 = vld [vmem:[%s3 + $0x20] sm:$0xf]
    %v174 = vld [vmem:[%s3 + $0x24] sm:$0xf]
    %v175 = vld [vmem:[%s3 + $0x28] sm:$0xf]
    %v176 = vld [vmem:[%s3 + $0x2c] sm:$0xf]
    %v177 = vld [vmem:[%s3 + $0x30] sm:$0xf]
    %v178 = vld [vmem:[%s3 + $0x34] sm:$0xf]
    %v179 = vld [vmem:[%s3 + $0x38] sm:$0xf]
    %v180 = vld [vmem:[%s3 + $0x3c] sm:$0xf]
    %v181 = vld [vmem:[%s3 + $0x40] sm:$0xf]
    %v182 = vld [vmem:[%s3 + $0x44] sm:$0xf]
    %v183 = vld [vmem:[%s3 + $0x48] sm:$0xf]
    %v184 = vld [vmem:[%s3 + $0x4c] sm:$0xf]
    %v185 = vld [vmem:[%s3 + $0x50] sm:$0xf]
    %v186 = vld [vmem:[%s3 + $0x54] sm:$0xf]
    %v187 = vld [vmem:[%s3 + $0x58] sm:$0xf]
    %v188 = vld [vmem:[%s3 + $0x5c] sm:$0xf]
    %v189 = vld [vmem:[%s3 + $0x60] sm:$0xf]
    %v190 = vld [vmem:[%s3 + $0x64] sm:$0xf]
    %v191 = vld [vmem:[%s3 + $0x68] sm:$0xf]
    %v192 = vld [vmem:[%s3 + $0x6c] sm:$0xf]
    %v193 = vld [vmem:[%s3 + $0x70] sm:$0xf]
    %v194 = vld [vmem:[%s3 + $0x74] sm:$0xf]
    %v195 = vld [vmem:[%s3 + $0x78] sm:$0xf]
    %v196 = vld [vmem:[%s3 + $0x7c] sm:$0xf]
    %v197 = vld [vmem:[%s4] sm:$0x1]
    %v230 = vunpack.c.l.b16 %v165
    %v231 = vunpack.c.l.b16 %v166
    %v232 = vunpack.c.l.b16 %v167
    %v233 = vunpack.c.l.b16 %v168
    %v234 = vunpack.c.l.b16 %v169
    %v235 = vunpack.c.l.b16 %v170
    %v236 = vunpack.c.l.b16 %v171
    %v237 = vunpack.c.l.b16 %v172
    %v238 = vunpack.c.l.b16 %v173
    %v239 = vunpack.c.l.b16 %v174
    %v240 = vunpack.c.l.b16 %v175
    %v241 = vunpack.c.l.b16 %v176
    %v242 = vunpack.c.l.b16 %v177
    %v243 = vunpack.c.l.b16 %v178
    %v244 = vunpack.c.l.b16 %v179
    %v245 = vunpack.c.l.b16 %v180
    %v246 = vunpack.c.l.b16 %v181
    %v247 = vunpack.c.l.b16 %v182
    %v248 = vunpack.c.l.b16 %v183
    %v249 = vunpack.c.l.b16 %v184
    %v250 = vunpack.c.l.b16 %v185
    %v251 = vunpack.c.l.b16 %v186
    %v252 = vunpack.c.l.b16 %v187
    %v253 = vunpack.c.l.b16 %v188
    %v254 = vunpack.c.l.b16 %v189
    %v255 = vunpack.c.l.b16 %v190
    %v256 = vunpack.c.l.b16 %v191
    %v257 = vunpack.c.l.b16 %v192
    %v258 = vunpack.c.l.b16 %v193
    %v259 = vunpack.c.l.b16 %v194
    %v260 = vunpack.c.l.b16 %v195
    %v261 = vunpack.c.l.b16 %v196
    %v262 = vpack.c.b16 %v231, %v230
    %v263 = vpack.c.b16 %v233, %v232
    %v264 = vpack.c.b16 %v235, %v234
    %v265 = vpack.c.b16 %v237, %v236
    %v266 = vpack.c.b16 %v239, %v238
    %v267 = vpack.c.b16 %v241, %v240
    %v268 = vpack.c.b16 %v243, %v242
    %v269 = vpack.c.b16 %v245, %v244
    %v270 = vpack.c.b16 %v247, %v246
    %v271 = vpack.c.b16 %v249, %v248
    %v272 = vpack.c.b16 %v251, %v250
    %v273 = vpack.c.b16 %v253, %v252
    %v274 = vpack.c.b16 %v255, %v254
    %v275 = vpack.c.b16 %v257, %v256
    %v276 = vpack.c.b16 %v259, %v258
    %v277 = vpack.c.b16 %v261, %v260
    %294 = vmatprep.subr.bf16.mxu0 0
    %295 = vmatpush1.bf16.msra.mxu0 %v262
    %296 = vmatprep.subr.bf16.mxu0 0
    %297 = vmatpush1.bf16.msra.mxu0 %v263
    %298 = vmatprep.subr.bf16.mxu0 0
    %299 = vmatpush1.bf16.msra.mxu0 %v264
    %300 = vmatprep.subr.bf16.mxu0 0
    %301 = vmatpush1.bf16.msra.mxu0 %v265
    %302 = vmatprep.subr.bf16.mxu0 0
    %303 = vmatpush1.bf16.msra.mxu0 %v266
    %304 = vmatprep.subr.bf16.mxu0 0
    %305 = vmatpush1.bf16.msra.mxu0 %v267
    %306 = vmatprep.subr.bf16.mxu0 0
    %307 = vmatpush1.bf16.msra.mxu0 %v268
    %308 = vmatprep.subr.bf16.mxu0 0
    %309 = vmatpush1.bf16.msra.mxu0 %v269
    %310 = vmatprep.subr.bf16.mxu0 0
    %311 = vmatpush1.bf16.msra.mxu0 %v270
    %312 = vmatprep.subr.bf16.mxu0 0
    %313 = vmatpush1.bf16.msra.mxu0 %v271
    %314 = vmatprep.subr.bf16.mxu0 0
    %315 = vmatpush1.bf16.msra.mxu0 %v272
    %316 = vmatprep.subr.bf16.mxu0 0
    %317 = vmatpush1.bf16.msra.mxu0 %v273
    %318 = vmatprep.subr.bf16.mxu0 0
    %319 = vmatpush1.bf16.msra.mxu0 %v274
    %320 = vmatprep.subr.bf16.mxu0 0
    %321 = vmatpush1.bf16.msra.mxu0 %v275
    %322 = vmatprep.subr.bf16.mxu0 0
    %323 = vmatpush1.bf16.msra.mxu0 %v276
    %324 = vmatprep.subr.bf16.mxu0 0
    %325 = vmatpush1.bf16.msra.mxu0 %v277
    %326 = vmatprep.mubr.bf16.mxu0 %v164
    %327 = vmatmul.mubr.bf16.gmra.mrb[0].mxu0 %v163
    %v328 = vpop.f32.mrb[0].mxu0
    %v329 = vadd.f32 %v197, %v328
    %v330 = vpop.f32.mrb[0].mxu0
    %v331 = vpop.f32.mrb[0].mxu0
    %v332 = vpop.f32.mrb[0].mxu0
    %333 = vdwg.mxu0
    %v334 = vxor.u32 %v329, 2147483648
    %v335 = vmul.f32 %v334, 1.442695
    %v336 = vpow.pop %v335
    %v337 = vadd.f32 %v336, 1.0
    %v338 = vrcp.pop %v337
    %v339 = vmul.f32 1.0, %v338
    %v340 = vmul.f32 %v329, %v339
    %v341 = vpack.c.bf16 %v340, %v340
    %v342 = vld [vmem:[#allocation2] sm:$0xff]
    %v343 = vld [vmem:[#allocation2 + $0x8] sm:$0xff]
    %v344 = vld [vmem:[#allocation2 + $0x10] sm:$0xff]
    %v345 = vld [vmem:[#allocation2 + $0x18] sm:$0xff]
    %v346 = vld [vmem:[#allocation2 + $0x20] sm:$0xff]
    %v347 = vld [vmem:[#allocation2 + $0x28] sm:$0xff]
    %v348 = vld [vmem:[#allocation2 + $0x30] sm:$0xff]
    %v349 = vld [vmem:[#allocation2 + $0x38] sm:$0xff]
    %v350 = vld [vmem:[#allocation2 + $0x40] sm:$0xff]
    %v351 = vld [vmem:[#allocation2 + $0x48] sm:$0xff]
    %v352 = vld [vmem:[#allocation2 + $0x50] sm:$0xff]
    %v353 = vld [vmem:[#allocation2 + $0x58] sm:$0xff]
    %v354 = vld [vmem:[#allocation2 + $0x60] sm:$0xff]
    %v355 = vld [vmem:[#allocation2 + $0x68] sm:$0xff]
    %v356 = vld [vmem:[#allocation2 + $0x70] sm:$0xff]
    %v357 = vld [vmem:[#allocation2 + $0x78] sm:$0xff]
    %v358 = vld [vmem:[#allocation2 + $0x80] sm:$0xff]
    %v359 = vld [vmem:[#allocation2 + $0x88] sm:$0xff]
    %v360 = vld [vmem:[#allocation2 + $0x90] sm:$0xff]
    %v361 = vld [vmem:[#allocation2 + $0x98] sm:$0xff]
    %v362 = vld [vmem:[#allocation2 + $0xa0] sm:$0xff]
    %v363 = vld [vmem:[#allocation2 + $0xa8] sm:$0xff]
    %v364 = vld [vmem:[#allocation2 + $0xb0] sm:$0xff]
    %v365 = vld [vmem:[#allocation2 + $0xb8] sm:$0xff]
    %v366 = vld [vmem:[#allocation2 + $0xc0] sm:$0xff]
    %v367 = vld [vmem:[#allocation2 + $0xc8] sm:$0xff]
    %v368 = vld [vmem:[#allocation2 + $0xd0] sm:$0xff]
    %v369 = vld [vmem:[#allocation2 + $0xd8] sm:$0xff]
    %v370 = vld [vmem:[#allocation2 + $0xe0] sm:$0xff]
    %v371 = vld [vmem:[#allocation2 + $0xe8] sm:$0xff]
    %v372 = vld [vmem:[#allocation2 + $0xf0] sm:$0xff]
    %v373 = vld [vmem:[#allocation2 + $0xf8] sm:$0xff]
    %v374 = vld [vmem:[#allocation2 + $0x100] sm:$0xff]
    %v375 = vld [vmem:[#allocation2 + $0x108] sm:$0xff]
    %v376 = vld [vmem:[#allocation2 + $0x110] sm:$0xff]
    %v377 = vld [vmem:[#allocation2 + $0x118] sm:$0xff]
    %v378 = vld [vmem:[#allocation2 + $0x120] sm:$0xff]
    %v379 = vld [vmem:[#allocation2 + $0x128] sm:$0xff]
    %v380 = vld [vmem:[#allocation2 + $0x130] sm:$0xff]
    %v381 = vld [vmem:[#allocation2 + $0x138] sm:$0xff]
    %v382 = vld [vmem:[#allocation2 + $0x140] sm:$0xff]
    %v383 = vld [vmem:[#allocation2 + $0x148] sm:$0xff]
    %v384 = vld [vmem:[#allocation2 + $0x150] sm:$0xff]
    %v385 = vld [vmem:[#allocation2 + $0x158] sm:$0xff]
    %v386 = vld [vmem:[#allocation2 + $0x160] sm:$0xff]
    %v387 = vld [vmem:[#allocation2 + $0x168] sm:$0xff]
    %v388 = vld [vmem:[#allocation2 + $0x170] sm:$0xff]
    %v389 = vld [vmem:[#allocation2 + $0x178] sm:$0xff]
    %v390 = vld [vmem:[#allocation2 + $0x180] sm:$0xff]
    %v391 = vld [vmem:[#allocation2 + $0x188] sm:$0xff]
    %v392 = vld [vmem:[#allocation2 + $0x190] sm:$0xff]
    %v393 = vld [vmem:[#allocation2 + $0x198] sm:$0xff]
    %v394 = vld [vmem:[#allocation2 + $0x1a0] sm:$0xff]
    %v395 = vld [vmem:[#allocation2 + $0x1a8] sm:$0xff]
    %v396 = vld [vmem:[#allocation2 + $0x1b0] sm:$0xff]
    %v397 = vld [vmem:[#allocation2 + $0x1b8] sm:$0xff]
    %v398 = vld [vmem:[#allocation2 + $0x1c0] sm:$0xff]
    %v399 = vld [vmem:[#allocation2 + $0x1c8] sm:$0xff]
    %v400 = vld [vmem:[#allocation2 + $0x1d0] sm:$0xff]
    %v401 = vld [vmem:[#allocation2 + $0x1d8] sm:$0xff]
    %v402 = vld [vmem:[#allocation2 + $0x1e0] sm:$0xff]
    %v403 = vld [vmem:[#allocation2 + $0x1e8] sm:$0xff]
    %v404 = vld [vmem:[#allocation2 + $0x1f0] sm:$0xff]
    %v405 = vld [vmem:[#allocation2 + $0x1f8] sm:$0xff]
    %v406 = vld [vmem:[#allocation2 + $0x200] sm:$0xff]
    %v407 = vld [vmem:[#allocation2 + $0x208] sm:$0xff]
    %v408 = vld [vmem:[#allocation2 + $0x210] sm:$0xff]
    %v409 = vld [vmem:[#allocation2 + $0x218] sm:$0xff]
    %v410 = vld [vmem:[#allocation2 + $0x220] sm:$0xff]
    %v411 = vld [vmem:[#allocation2 + $0x228] sm:$0xff]
    %v412 = vld [vmem:[#allocation2 + $0x230] sm:$0xff]
    %v413 = vld [vmem:[#allocation2 + $0x238] sm:$0xff]
    %v414 = vld [vmem:[#allocation2 + $0x240] sm:$0xff]
    %v415 = vld [vmem:[#allocation2 + $0x248] sm:$0xff]
    %v416 = vld [vmem:[#allocation2 + $0x250] sm:$0xff]
    %v417 = vld [vmem:[#allocation2 + $0x258] sm:$0xff]
    %v418 = vld [vmem:[#allocation2 + $0x260] sm:$0xff]
    %v419 = vld [vmem:[#allocation2 + $0x268] sm:$0xff]
    %v420 = vld [vmem:[#allocation2 + $0x270] sm:$0xff]
    %v421 = vld [vmem:[#allocation2 + $0x278] sm:$0xff]
    %v422 = vld [vmem:[#allocation2 + $0x280] sm:$0xff]
    %v423 = vld [vmem:[#allocation2 + $0x288] sm:$0xff]
    %v424 = vld [vmem:[#allocation2 + $0x290] sm:$0xff]
    %v425 = vld [vmem:[#allocation2 + $0x298] sm:$0xff]
    %v426 = vld [vmem:[#allocation2 + $0x2a0] sm:$0xff]
    %v427 = vld [vmem:[#allocation2 + $0x2a8] sm:$0xff]
    %v428 = vld [vmem:[#allocation2 + $0x2b0] sm:$0xff]
    %v429 = vld [vmem:[#allocation2 + $0x2b8] sm:$0xff]
    %v430 = vld [vmem:[#allocation2 + $0x2c0] sm:$0xff]
    %v431 = vld [vmem:[#allocation2 + $0x2c8] sm:$0xff]
    %v432 = vld [vmem:[#allocation2 + $0x2d0] sm:$0xff]
    %v433 = vld [vmem:[#allocation2 + $0x2d8] sm:$0xff]
    %v434 = vld [vmem:[#allocation2 + $0x2e0] sm:$0xff]
    %v435 = vld [vmem:[#allocation2 + $0x2e8] sm:$0xff]
    %v436 = vld [vmem:[#allocation2 + $0x2f0] sm:$0xff]
    %v437 = vld [vmem:[#allocation2 + $0x2f8] sm:$0xff]
    %v438 = vld [vmem:[#allocation2 + $0x300] sm:$0xff]
    %v439 = vld [vmem:[#allocation2 + $0x308] sm:$0xff]
    %v440 = vld [vmem:[#allocation2 + $0x310] sm:$0xff]
    %v441 = vld [vmem:[#allocation2 + $0x318] sm:$0xff]
    %v442 = vld [vmem:[#allocation2 + $0x320] sm:$0xff]
    %v443 = vld [vmem:[#allocation2 + $0x328] sm:$0xff]
    %v444 = vld [vmem:[#allocation2 + $0x330] sm:$0xff]
    %v445 = vld [vmem:[#allocation2 + $0x338] sm:$0xff]
    %v446 = vld [vmem:[#allocation2 + $0x340] sm:$0xff]
    %v447 = vld [vmem:[#allocation2 + $0x348] sm:$0xff]
    %v448 = vld [vmem:[#allocation2 + $0x350] sm:$0xff]
    %v449 = vld [vmem:[#allocation2 + $0x358] sm:$0xff]
    %v450 = vld [vmem:[#allocation2 + $0x360] sm:$0xff]
    %v451 = vld [vmem:[#allocation2 + $0x368] sm:$0xff]
    %v452 = vld [vmem:[#allocation2 + $0x370] sm:$0xff]
    %v453 = vld [vmem:[#allocation2 + $0x378] sm:$0xff]
    %v454 = vld [vmem:[#allocation2 + $0x380] sm:$0xff]
    %v455 = vld [vmem:[#allocation2 + $0x388] sm:$0xff]
    %v456 = vld [vmem:[#allocation2 + $0x390] sm:$0xff]
    %v457 = vld [vmem:[#allocation2 + $0x398] sm:$0xff]
    %v458 = vld [vmem:[#allocation2 + $0x3a0] sm:$0xff]
    %v459 = vld [vmem:[#allocation2 + $0x3a8] sm:$0xff]
    %v460 = vld [vmem:[#allocation2 + $0x3b0] sm:$0xff]
    %v461 = vld [vmem:[#allocation2 + $0x3b8] sm:$0xff]
    %v462 = vld [vmem:[#allocation2 + $0x3c0] sm:$0xff]
    %v463 = vld [vmem:[#allocation2 + $0x3c8] sm:$0xff]
    %v464 = vld [vmem:[#allocation2 + $0x3d0] sm:$0xff]
    %v465 = vld [vmem:[#allocation2 + $0x3d8] sm:$0xff]
    %v466 = vld [vmem:[#allocation2 + $0x3e0] sm:$0xff]
    %v467 = vld [vmem:[#allocation2 + $0x3e8] sm:$0xff]
    %v468 = vld [vmem:[#allocation2 + $0x3f0] sm:$0xff]
    %v469 = vld [vmem:[#allocation2 + $0x3f8] sm:$0xff]
    %v470 = vld [vmem:[%s6] sm:$0xff]
    %v471 = vld [vmem:[%s6 + $0x8] sm:$0xff]
    %v472 = vld [vmem:[%s6 + $0x10] sm:$0xff]
    %v473 = vld [vmem:[%s6 + $0x18] sm:$0xff]
    %v602 = vunpack.c.l.b16 %v342
    %v603 = vunpack.c.h.b16 %v342
    %v604 = vunpack.c.l.b16 %v343
    %v605 = vunpack.c.h.b16 %v343
    %v606 = vunpack.c.l.b16 %v344
    %v607 = vunpack.c.h.b16 %v344
    %v608 = vunpack.c.l.b16 %v345
    %v609 = vunpack.c.h.b16 %v345
    %v610 = vunpack.c.l.b16 %v346
    %v611 = vunpack.c.h.b16 %v346
    %v612 = vunpack.c.l.b16 %v347
    %v613 = vunpack.c.h.b16 %v347
    %v614 = vunpack.c.l.b16 %v348
    %v615 = vunpack.c.h.b16 %v348
    %v616 = vunpack.c.l.b16 %v349
    %v617 = vunpack.c.h.b16 %v349
    %v618 = vunpack.c.l.b16 %v350
    %v619 = vunpack.c.h.b16 %v350
    %v620 = vunpack.c.l.b16 %v351
    %v621 = vunpack.c.h.b16 %v351
    %v622 = vunpack.c.l.b16 %v352
    %v623 = vunpack.c.h.b16 %v352
    %v624 = vunpack.c.l.b16 %v353
    %v625 = vunpack.c.h.b16 %v353
    %v626 = vunpack.c.l.b16 %v354
    %v627 = vunpack.c.h.b16 %v354
    %v628 = vunpack.c.l.b16 %v355
    %v629 = vunpack.c.h.b16 %v355
    %v630 = vunpack.c.l.b16 %v356
    %v631 = vunpack.c.h.b16 %v356
    %v632 = vunpack.c.l.b16 %v357
    %v633 = vunpack.c.h.b16 %v357
    %v634 = vunpack.c.l.b16 %v358
    %v635 = vunpack.c.h.b16 %v358
    %v636 = vunpack.c.l.b16 %v359
    %v637 = vunpack.c.h.b16 %v359
    %v638 = vunpack.c.l.b16 %v360
    %v639 = vunpack.c.h.b16 %v360
    %v640 = vunpack.c.l.b16 %v361
    %v641 = vunpack.c.h.b16 %v361
    %v642 = vunpack.c.l.b16 %v362
    %v643 = vunpack.c.h.b16 %v362
    %v644 = vunpack.c.l.b16 %v363
    %v645 = vunpack.c.h.b16 %v363
    %v646 = vunpack.c.l.b16 %v364
    %v647 = vunpack.c.h.b16 %v364
    %v648 = vunpack.c.l.b16 %v365
    %v649 = vunpack.c.h.b16 %v365
    %v650 = vunpack.c.l.b16 %v366
    %v651 = vunpack.c.h.b16 %v366
    %v652 = vunpack.c.l.b16 %v367
    %v653 = vunpack.c.h.b16 %v367
    %v654 = vunpack.c.l.b16 %v368
    %v655 = vunpack.c.h.b16 %v368
    %v656 = vunpack.c.l.b16 %v369
    %v657 = vunpack.c.h.b16 %v369
    %v658 = vunpack.c.l.b16 %v370
    %v659 = vunpack.c.h.b16 %v370
    %v660 = vunpack.c.l.b16 %v371
    %v661 = vunpack.c.h.b16 %v371
    %v662 = vunpack.c.l.b16 %v372
    %v663 = vunpack.c.h.b16 %v372
    %v664 = vunpack.c.l.b16 %v373
    %v665 = vunpack.c.h.b16 %v373
    %v666 = vunpack.c.l.b16 %v374
    %v667 = vunpack.c.h.b16 %v374
    %v668 = vunpack.c.l.b16 %v375
    %v669 = vunpack.c.h.b16 %v375
    %v670 = vunpack.c.l.b16 %v376
    %v671 = vunpack.c.h.b16 %v376
    %v672 = vunpack.c.l.b16 %v377
    %v673 = vunpack.c.h.b16 %v377
    %v674 = vunpack.c.l.b16 %v378
    %v675 = vunpack.c.h.b16 %v378
    %v676 = vunpack.c.l.b16 %v379
    %v677 = vunpack.c.h.b16 %v379
    %v678 = vunpack.c.l.b16 %v380
    %v679 = vunpack.c.h.b16 %v380
    %v680 = vunpack.c.l.b16 %v381
    %v681 = vunpack.c.h.b16 %v381
    %v682 = vunpack.c.l.b16 %v382
    %v683 = vunpack.c.h.b16 %v382
    %v684 = vunpack.c.l.b16 %v383
    %v685 = vunpack.c.h.b16 %v383
    %v686 = vunpack.c.l.b16 %v384
    %v687 = vunpack.c.h.b16 %v384
    %v688 = vunpack.c.l.b16 %v385
    %v689 = vunpack.c.h.b16 %v385
    %v690 = vunpack.c.l.b16 %v386
    %v691 = vunpack.c.h.b16 %v386
    %v692 = vunpack.c.l.b16 %v387
    %v693 = vunpack.c.h.b16 %v387
    %v694 = vunpack.c.l.b16 %v388
    %v695 = vunpack.c.h.b16 %v388
    %v696 = vunpack.c.l.b16 %v389
    %v697 = vunpack.c.h.b16 %v389
    %v698 = vunpack.c.l.b16 %v390
    %v699 = vunpack.c.h.b16 %v390
    %v700 = vunpack.c.l.b16 %v391
    %v701 = vunpack.c.h.b16 %v391
    %v702 = vunpack.c.l.b16 %v392
    %v703 = vunpack.c.h.b16 %v392
    %v704 = vunpack.c.l.b16 %v393
    %v705 = vunpack.c.h.b16 %v393
    %v706 = vunpack.c.l.b16 %v394
    %v707 = vunpack.c.h.b16 %v394
    %v708 = vunpack.c.l.b16 %v395
    %v709 = vunpack.c.h.b16 %v395
    %v710 = vunpack.c.l.b16 %v396
    %v711 = vunpack.c.h.b16 %v396
    %v712 = vunpack.c.l.b16 %v397
    %v713 = vunpack.c.h.b16 %v397
    %v714 = vunpack.c.l.b16 %v398
    %v715 = vunpack.c.h.b16 %v398
    %v716 = vunpack.c.l.b16 %v399
    %v717 = vunpack.c.h.b16 %v399
    %v718 = vunpack.c.l.b16 %v400
    %v719 = vunpack.c.h.b16 %v400
    %v720 = vunpack.c.l.b16 %v401
    %v721 = vunpack.c.h.b16 %v401
    %v722 = vunpack.c.l.b16 %v402
    %v723 = vunpack.c.h.b16 %v402
    %v724 = vunpack.c.l.b16 %v403
    %v725 = vunpack.c.h.b16 %v403
    %v726 = vunpack.c.l.b16 %v404
    %v727 = vunpack.c.h.b16 %v404
    %v728 = vunpack.c.l.b16 %v405
    %v729 = vunpack.c.h.b16 %v405
    %v730 = vunpack.c.l.b16 %v406
    %v731 = vunpack.c.h.b16 %v406
    %v732 = vunpack.c.l.b16 %v407
    %v733 = vunpack.c.h.b16 %v407
    %v734 = vunpack.c.l.b16 %v408
    %v735 = vunpack.c.h.b16 %v408
    %v736 = vunpack.c.l.b16 %v409
    %v737 = vunpack.c.h.b16 %v409
    %v738 = vunpack.c.l.b16 %v410
    %v739 = vunpack.c.h.b16 %v410
    %v740 = vunpack.c.l.b16 %v411
    %v741 = vunpack.c.h.b16 %v411
    %v742 = vunpack.c.l.b16 %v412
    %v743 = vunpack.c.h.b16 %v412
    %v744 = vunpack.c.l.b16 %v413
    %v745 = vunpack.c.h.b16 %v413
    %v746 = vunpack.c.l.b16 %v414
    %v747 = vunpack.c.h.b16 %v414
    %v748 = vunpack.c.l.b16 %v415
    %v749 = vunpack.c.h.b16 %v415
    %v750 = vunpack.c.l.b16 %v416
    %v751 = vunpack.c.h.b16 %v416
    %v752 = vunpack.c.l.b16 %v417
    %v753 = vunpack.c.h.b16 %v417
    %v754 = vunpack.c.l.b16 %v418
    %v755 = vunpack.c.h.b16 %v418
    %v756 = vunpack.c.l.b16 %v419
    %v757 = vunpack.c.h.b16 %v419
    %v758 = vunpack.c.l.b16 %v420
    %v759 = vunpack.c.h.b16 %v420
    %v760 = vunpack.c.l.b16 %v421
    %v761 = vunpack.c.h.b16 %v421
    %v762 = vunpack.c.l.b16 %v422
    %v763 = vunpack.c.h.b16 %v422
    %v764 = vunpack.c.l.b16 %v423
    %v765 = vunpack.c.h.b16 %v423
    %v766 = vunpack.c.l.b16 %v424
    %v767 = vunpack.c.h.b16 %v424
    %v768 = vunpack.c.l.b16 %v425
    %v769 = vunpack.c.h.b16 %v425
    %v770 = vunpack.c.l.b16 %v426
    %v771 = vunpack.c.h.b16 %v426
    %v772 = vunpack.c.l.b16 %v427
    %v773 = vunpack.c.h.b16 %v427
    %v774 = vunpack.c.l.b16 %v428
    %v775 = vunpack.c.h.b16 %v428
    %v776 = vunpack.c.l.b16 %v429
    %v777 = vunpack.c.h.b16 %v429
    %v778 = vunpack.c.l.b16 %v430
    %v779 = vunpack.c.h.b16 %v430
    %v780 = vunpack.c.l.b16 %v431
    %v781 = vunpack.c.h.b16 %v431
    %v782 = vunpack.c.l.b16 %v432
    %v783 = vunpack.c.h.b16 %v432
    %v784 = vunpack.c.l.b16 %v433
    %v785 = vunpack.c.h.b16 %v433
    %v786 = vunpack.c.l.b16 %v434
    %v787 = vunpack.c.h.b16 %v434
    %v788 = vunpack.c.l.b16 %v435
    %v789 = vunpack.c.h.b16 %v435
    %v790 = vunpack.c.l.b16 %v436
    %v791 = vunpack.c.h.b16 %v436
    %v792 = vunpack.c.l.b16 %v437
    %v793 = vunpack.c.h.b16 %v437
    %v794 = vunpack.c.l.b16 %v438
    %v795 = vunpack.c.h.b16 %v438
    %v796 = vunpack.c.l.b16 %v439
    %v797 = vunpack.c.h.b16 %v439
    %v798 = vunpack.c.l.b16 %v440
    %v799 = vunpack.c.h.b16 %v440
    %v800 = vunpack.c.l.b16 %v441
    %v801 = vunpack.c.h.b16 %v441
    %v802 = vunpack.c.l.b16 %v442
    %v803 = vunpack.c.h.b16 %v442
    %v804 = vunpack.c.l.b16 %v443
    %v805 = vunpack.c.h.b16 %v443
    %v806 = vunpack.c.l.b16 %v444
    %v807 = vunpack.c.h.b16 %v444
    %v808 = vunpack.c.l.b16 %v445
    %v809 = vunpack.c.h.b16 %v445
    %v810 = vunpack.c.l.b16 %v446
    %v811 = vunpack.c.h.b16 %v446
    %v812 = vunpack.c.l.b16 %v447
    %v813 = vunpack.c.h.b16 %v447
    %v814 = vunpack.c.l.b16 %v448
    %v815 = vunpack.c.h.b16 %v448
    %v816 = vunpack.c.l.b16 %v449
    %v817 = vunpack.c.h.b16 %v449
    %v818 = vunpack.c.l.b16 %v450
    %v819 = vunpack.c.h.b16 %v450
    %v820 = vunpack.c.l.b16 %v451
    %v821 = vunpack.c.h.b16 %v451
    %v822 = vunpack.c.l.b16 %v452
    %v823 = vunpack.c.h.b16 %v452
    %v824 = vunpack.c.l.b16 %v453
    %v825 = vunpack.c.h.b16 %v453
    %v826 = vunpack.c.l.b16 %v454
    %v827 = vunpack.c.h.b16 %v454
    %v828 = vunpack.c.l.b16 %v455
    %v829 = vunpack.c.h.b16 %v455
    %v830 = vunpack.c.l.b16 %v456
    %v831 = vunpack.c.h.b16 %v456
    %v832 = vunpack.c.l.b16 %v457
    %v833 = vunpack.c.h.b16 %v457
    %v834 = vunpack.c.l.b16 %v458
    %v835 = vunpack.c.h.b16 %v458
    %v836 = vunpack.c.l.b16 %v459
    %v837 = vunpack.c.h.b16 %v459
    %v838 = vunpack.c.l.b16 %v460
    %v839 = vunpack.c.h.b16 %v460
    %v840 = vunpack.c.l.b16 %v461
    %v841 = vunpack.c.h.b16 %v461
    %v842 = vunpack.c.l.b16 %v462
    %v843 = vunpack.c.h.b16 %v462
    %v844 = vunpack.c.l.b16 %v463
    %v845 = vunpack.c.h.b16 %v463
    %v846 = vunpack.c.l.b16 %v464
    %v847 = vunpack.c.h.b16 %v464
    %v848 = vunpack.c.l.b16 %v465
    %v849 = vunpack.c.h.b16 %v465
    %v850 = vunpack.c.l.b16 %v466
    %v851 = vunpack.c.h.b16 %v466
    %v852 = vunpack.c.l.b16 %v467
    %v853 = vunpack.c.h.b16 %v467
    %v854 = vunpack.c.l.b16 %v468
    %v855 = vunpack.c.h.b16 %v468
    %v856 = vunpack.c.l.b16 %v469
    %v857 = vunpack.c.h.b16 %v469
    %v858 = vpack.c.b16 %v634, %v602
    %v859 = vpack.c.b16 %v635, %v603
    %v860 = vpack.c.b16 %v636, %v604
    %v861 = vpack.c.b16 %v637, %v605
    %v862 = vpack.c.b16 %v638, %v606
    %v863 = vpack.c.b16 %v639, %v607
    %v864 = vpack.c.b16 %v640, %v608
    %v865 = vpack.c.b16 %v641, %v609
    %v866 = vpack.c.b16 %v642, %v610
    %v867 = vpack.c.b16 %v643, %v611
    %v868 = vpack.c.b16 %v644, %v612
    %v869 = vpack.c.b16 %v645, %v613
    %v870 = vpack.c.b16 %v646, %v614
    %v871 = vpack.c.b16 %v647, %v615
    %v872 = vpack.c.b16 %v648, %v616
    %v873 = vpack.c.b16 %v649, %v617
    %v874 = vpack.c.b16 %v650, %v618
    %v875 = vpack.c.b16 %v651, %v619
    %v876 = vpack.c.b16 %v652, %v620
    %v877 = vpack.c.b16 %v653, %v621
    %v878 = vpack.c.b16 %v654, %v622
    %v879 = vpack.c.b16 %v655, %v623
    %v880 = vpack.c.b16 %v656, %v624
    %v881 = vpack.c.b16 %v657, %v625
    %v882 = vpack.c.b16 %v658, %v626
    %v883 = vpack.c.b16 %v659, %v627
    %v884 = vpack.c.b16 %v660, %v628
    %v885 = vpack.c.b16 %v661, %v629
    %v886 = vpack.c.b16 %v662, %v630
    %v887 = vpack.c.b16 %v663, %v631
    %v888 = vpack.c.b16 %v664, %v632
    %v889 = vpack.c.b16 %v665, %v633
    %v890 = vpack.c.b16 %v698, %v666
    %v891 = vpack.c.b16 %v699, %v667
    %v892 = vpack.c.b16 %v700, %v668
    %v893 = vpack.c.b16 %v701, %v669
    %v894 = vpack.c.b16 %v702, %v670
    %v895 = vpack.c.b16 %v703, %v671
    %v896 = vpack.c.b16 %v704, %v672
    %v897 = vpack.c.b16 %v705, %v673
    %v898 = vpack.c.b16 %v706, %v674
    %v899 = vpack.c.b16 %v707, %v675
    %v900 = vpack.c.b16 %v708, %v676
    %v901 = vpack.c.b16 %v709, %v677
    %v902 = vpack.c.b16 %v710, %v678
    %v903 = vpack.c.b16 %v711, %v679
    %v904 = vpack.c.b16 %v712, %v680
    %v905 = vpack.c.b16 %v713, %v681
    %v906 = vpack.c.b16 %v714, %v682
    %v907 = vpack.c.b16 %v715, %v683
    %v908 = vpack.c.b16 %v716, %v684
    %v909 = vpack.c.b16 %v717, %v685
    %v910 = vpack.c.b16 %v718, %v686
    %v911 = vpack.c.b16 %v719, %v687
    %v912 = vpack.c.b16 %v720, %v688
    %v913 = vpack.c.b16 %v721, %v689
    %v914 = vpack.c.b16 %v722, %v690
    %v915 = vpack.c.b16 %v723, %v691
    %v916 = vpack.c.b16 %v724, %v692
    %v917 = vpack.c.b16 %v725, %v693
    %v918 = vpack.c.b16 %v726, %v694
    %v919 = vpack.c.b16 %v727, %v695
    %v920 = vpack.c.b16 %v728, %v696
    %v921 = vpack.c.b16 %v729, %v697
    %v922 = vpack.c.b16 %v762, %v730
    %v923 = vpack.c.b16 %v763, %v731
    %v924 = vpack.c.b16 %v764, %v732
    %v925 = vpack.c.b16 %v765, %v733
    %v926 = vpack.c.b16 %v766, %v734
    %v927 = vpack.c.b16 %v767, %v735
    %v928 = vpack.c.b16 %v768, %v736
    %v929 = vpack.c.b16 %v769, %v737
    %v930 = vpack.c.b16 %v770, %v738
    %v931 = vpack.c.b16 %v771, %v739
    %v932 = vpack.c.b16 %v772, %v740
    %v933 = vpack.c.b16 %v773, %v741
    %v934 = vpack.c.b16 %v774, %v742
    %v935 = vpack.c.b16 %v775, %v743
    %v936 = vpack.c.b16 %v776, %v744
    %v937 = vpack.c.b16 %v777, %v745
    %v938 = vpack.c.b16 %v778, %v746
    %v939 = vpack.c.b16 %v779, %v747
    %v940 = vpack.c.b16 %v780, %v748
    %v941 = vpack.c.b16 %v781, %v749
    %v942 = vpack.c.b16 %v782, %v750
    %v943 = vpack.c.b16 %v783, %v751
    %v944 = vpack.c.b16 %v784, %v752
    %v945 = vpack.c.b16 %v785, %v753
    %v946 = vpack.c.b16 %v786, %v754
    %v947 = vpack.c.b16 %v787, %v755
    %v948 = vpack.c.b16 %v788, %v756
    %v949 = vpack.c.b16 %v789, %v757
    %v950 = vpack.c.b16 %v790, %v758
    %v951 = vpack.c.b16 %v791, %v759
    %v952 = vpack.c.b16 %v792, %v760
    %v953 = vpack.c.b16 %v793, %v761
    %v954 = vpack.c.b16 %v826, %v794
    %v955 = vpack.c.b16 %v827, %v795
    %v956 = vpack.c.b16 %v828, %v796
    %v957 = vpack.c.b16 %v829, %v797
    %v958 = vpack.c.b16 %v830, %v798
    %v959 = vpack.c.b16 %v831, %v799
    %v960 = vpack.c.b16 %v832, %v800
    %v961 = vpack.c.b16 %v833, %v801
    %v962 = vpack.c.b16 %v834, %v802
    %v963 = vpack.c.b16 %v835, %v803
    %v964 = vpack.c.b16 %v836, %v804
    %v965 = vpack.c.b16 %v837, %v805
    %v966 = vpack.c.b16 %v838, %v806
    %v967 = vpack.c.b16 %v839, %v807
    %v968 = vpack.c.b16 %v840, %v808
    %v969 = vpack.c.b16 %v841, %v809
    %v970 = vpack.c.b16 %v842, %v810
    %v971 = vpack.c.b16 %v843, %v811
    %v972 = vpack.c.b16 %v844, %v812
    %v973 = vpack.c.b16 %v845, %v813
    %v974 = vpack.c.b16 %v846, %v814
    %v975 = vpack.c.b16 %v847, %v815
    %v976 = vpack.c.b16 %v848, %v816
    %v977 = vpack.c.b16 %v849, %v817
    %v978 = vpack.c.b16 %v850, %v818
    %v979 = vpack.c.b16 %v851, %v819
    %v980 = vpack.c.b16 %v852, %v820
    %v981 = vpack.c.b16 %v853, %v821
    %v982 = vpack.c.b16 %v854, %v822
    %v983 = vpack.c.b16 %v855, %v823
    %v984 = vpack.c.b16 %v856, %v824
    %v985 = vpack.c.b16 %v857, %v825
    %v1118 = vlaneseq
    %v1119 = vshrl.u32 %v1118, 7
    %v1120 = vsub.s32 0, %v1119
    %v1121 = vrot.slane %v470, %v1120
    %v1122 = vlaneseq
    %v1123 = vshrl.u32 %v1122, 7
    %v1124 = vsub.s32 1, %v1123
    %v1125 = vrot.slane %v470, %v1124
    %v1126 = vlaneseq
    %v1127 = vshrl.u32 %v1126, 7
    %v1128 = vsub.s32 2, %v1127
    %v1129 = vrot.slane %v470, %v1128
    %v1130 = vlaneseq
    %v1131 = vshrl.u32 %v1130, 7
    %v1132 = vsub.s32 3, %v1131
    %v1133 = vrot.slane %v470, %v1132
    %v1134 = vlaneseq
    %v1135 = vshrl.u32 %v1134, 7
    %v1136 = vsub.s32 4, %v1135
    %v1137 = vrot.slane %v470, %v1136
    %v1138 = vlaneseq
    %v1139 = vshrl.u32 %v1138, 7
    %v1140 = vsub.s32 5, %v1139
    %v1141 = vrot.slane %v470, %v1140
    %v1142 = vlaneseq
    %v1143 = vshrl.u32 %v1142, 7
    %v1144 = vsub.s32 6, %v1143
    %v1145 = vrot.slane %v470, %v1144
    %v1146 = vlaneseq
    %v1147 = vshrl.u32 %v1146, 7
    %v1148 = vsub.s32 7, %v1147
    %v1149 = vrot.slane %v470, %v1148
    %v1150 = vlaneseq
    %v1151 = vshrl.u32 %v1150, 7
    %v1152 = vsub.s32 0, %v1151
    %v1153 = vrot.slane %v471, %v1152
    %v1154 = vlaneseq
    %v1155 = vshrl.u32 %v1154, 7
    %v1156 = vsub.s32 1, %v1155
    %v1157 = vrot.slane %v471, %v1156
    %v1158 = vlaneseq
    %v1159 = vshrl.u32 %v1158, 7
    %v1160 = vsub.s32 2, %v1159
    %v1161 = vrot.slane %v471, %v1160
    %v1162 = vlaneseq
    %v1163 = vshrl.u32 %v1162, 7
    %v1164 = vsub.s32 3, %v1163
    %v1165 = vrot.slane %v471, %v1164
    %v1166 = vlaneseq
    %v1167 = vshrl.u32 %v1166, 7
    %v1168 = vsub.s32 4, %v1167
    %v1169 = vrot.slane %v471, %v1168
    %v1170 = vlaneseq
    %v1171 = vshrl.u32 %v1170, 7
    %v1172 = vsub.s32 5, %v1171
    %v1173 = vrot.slane %v471, %v1172
    %v1174 = vlaneseq
    %v1175 = vshrl.u32 %v1174, 7
    %v1176 = vsub.s32 6, %v1175
    %v1177 = vrot.slane %v471, %v1176
    %v1178 = vlaneseq
    %v1179 = vshrl.u32 %v1178, 7
    %v1180 = vsub.s32 7, %v1179
    %v1181 = vrot.slane %v471, %v1180
    %v1182 = vlaneseq
    %v1183 = vshrl.u32 %v1182, 7
    %v1184 = vsub.s32 0, %v1183
    %v1185 = vrot.slane %v472, %v1184
    %v1186 = vlaneseq
    %v1187 = vshrl.u32 %v1186, 7
    %v1188 = vsub.s32 1, %v1187
    %v1189 = vrot.slane %v472, %v1188
    %v1190 = vlaneseq
    %v1191 = vshrl.u32 %v1190, 7
    %v1192 = vsub.s32 2, %v1191
    %v1193 = vrot.slane %v472, %v1192
    %v1194 = vlaneseq
    %v1195 = vshrl.u32 %v1194, 7
    %v1196 = vsub.s32 3, %v1195
    %v1197 = vrot.slane %v472, %v1196
    %v1198 = vlaneseq
    %v1199 = vshrl.u32 %v1198, 7
    %v1200 = vsub.s32 4, %v1199
    %v1201 = vrot.slane %v472, %v1200
    %v1202 = vlaneseq
    %v1203 = vshrl.u32 %v1202, 7
    %v1204 = vsub.s32 5, %v1203
    %v1205 = vrot.slane %v472, %v1204
    %v1206 = vlaneseq
    %v1207 = vshrl.u32 %v1206, 7
    %v1208 = vsub.s32 6, %v1207
    %v1209 = vrot.slane %v472, %v1208
    %v1210 = vlaneseq
    %v1211 = vshrl.u32 %v1210, 7
    %v1212 = vsub.s32 7, %v1211
    %v1213 = vrot.slane %v472, %v1212
    %v1214 = vlaneseq
    %v1215 = vshrl.u32 %v1214, 7
    %v1216 = vsub.s32 0, %v1215
    %v1217 = vrot.slane %v473, %v1216
    %v1218 = vlaneseq
    %v1219 = vshrl.u32 %v1218, 7
    %v1220 = vsub.s32 1, %v1219
    %v1221 = vrot.slane %v473, %v1220
    %v1222 = vlaneseq
    %v1223 = vshrl.u32 %v1222, 7
    %v1224 = vsub.s32 2, %v1223
    %v1225 = vrot.slane %v473, %v1224
    %v1226 = vlaneseq
    %v1227 = vshrl.u32 %v1226, 7
    %v1228 = vsub.s32 3, %v1227
    %v1229 = vrot.slane %v473, %v1228
    %v1230 = vlaneseq
    %v1231 = vshrl.u32 %v1230, 7
    %v1232 = vsub.s32 4, %v1231
    %v1233 = vrot.slane %v473, %v1232
    %v1234 = vlaneseq
    %v1235 = vshrl.u32 %v1234, 7
    %v1236 = vsub.s32 5, %v1235
    %v1237 = vrot.slane %v473, %v1236
    %v1238 = vlaneseq
    %v1239 = vshrl.u32 %v1238, 7
    %v1240 = vsub.s32 6, %v1239
    %v1241 = vrot.slane %v473, %v1240
    %v1242 = vlaneseq
    %v1243 = vshrl.u32 %v1242, 7
    %v1244 = vsub.s32 7, %v1243
    %v1245 = vrot.slane %v473, %v1244
    %v1279 = vsel %vm104, %v341, 0
    %1281 = vmatprep.subr.bf16.mxu0 %v859
    %1282 = vmatpush1.bf16.msra.mxu0 %v858
    %1283 = vmatprep.subr.bf16.mxu0 %v891
    %1284 = vmatpush1.bf16.msra.mxu0 %v890
    %1285 = vmatprep.subr.bf16.mxu0 %v923
    %1286 = vmatpush1.bf16.msra.mxu0 %v922
    %1287 = vmatprep.subr.bf16.mxu0 %v955
    %1288 = vmatpush1.bf16.msra.mxu0 %v954
    %1289 = vmatprep.subr.bf16.mxu0 0
    %1290 = vmatpush1.bf16.msra.mxu0 0
    %1291 = vmatprep.subr.bf16.mxu0 0
    %1292 = vmatpush1.bf16.msra.mxu0 0
    %1293 = vmatprep.subr.bf16.mxu0 0
    %1294 = vmatpush1.bf16.msra.mxu0 0
    %1295 = vmatprep.subr.bf16.mxu0 0
    %1296 = vmatpush1.bf16.msra.mxu0 0
    %1297 = vmatprep.subr.bf16.mxu0 0
    %1298 = vmatpush1.bf16.msra.mxu0 0
    %1299 = vmatprep.subr.bf16.mxu0 0
    %1300 = vmatpush1.bf16.msra.mxu0 0
    %1301 = vmatprep.subr.bf16.mxu0 0
    %1302 = vmatpush1.bf16.msra.mxu0 0
    %1303 = vmatprep.subr.bf16.mxu0 0
    %1304 = vmatpush1.bf16.msra.mxu0 0
    %1305 = vmatprep.subr.bf16.mxu0 0
    %1306 = vmatpush1.bf16.msra.mxu0 0
    %1307 = vmatprep.subr.bf16.mxu0 0
    %1308 = vmatpush1.bf16.msra.mxu0 0
    %1309 = vmatprep.subr.bf16.mxu0 0
    %1310 = vmatpush1.bf16.msra.mxu0 0
    %1311 = vmatprep.subr.bf16.mxu0 0
    %1312 = vmatpush1.bf16.msra.mxu0 0
    %1313 = vmatprep.mubr.bf16.mxu0 0
    %1314 = vmatmul.mubr.bf16.gmra.mrb[0].mxu0 %v1279
    %v1315 = vpop.f32.mrb[0].mxu0
    %v1316 = vadd.f32 %v1121, %v1315
    %v1317 = vpop.f32.mrb[0].mxu0
    %v1318 = vadd.f32 %v1125, %v1317
    %v1319 = vpop.f32.mrb[0].mxu0
    %v1320 = vpop.f32.mrb[0].mxu0
    %1321 = vdwg.mxu0
    %1322 = vmatprep.subr.bf16.mxu0 %v861
    %1323 = vmatpush1.bf16.msra.mxu0 %v860
    %1324 = vmatprep.subr.bf16.mxu0 %v893
    %1325 = vmatpush1.bf16.msra.mxu0 %v892
    %1326 = vmatprep.subr.bf16.mxu0 %v925
    %1327 = vmatpush1.bf16.msra.mxu0 %v924
    %1328 = vmatprep.subr.bf16.mxu0 %v957
    %1329 = vmatpush1.bf16.msra.mxu0 %v956
    %1330 = vmatprep.subr.bf16.mxu0 0
    %1331 = vmatpush1.bf16.msra.mxu0 0
    %1332 = vmatprep.subr.bf16.mxu0 0
    %1333 = vmatpush1.bf16.msra.mxu0 0
    %1334 = vmatprep.subr.bf16.mxu0 0
    %1335 = vmatpush1.bf16.msra.mxu0 0
    %1336 = vmatprep.subr.bf16.mxu0 0
    %1337 = vmatpush1.bf16.msra.mxu0 0
    %1338 = vmatprep.subr.bf16.mxu0 0
    %1339 = vmatpush1.bf16.msra.mxu0 0
    %1340 = vmatprep.subr.bf16.mxu0 0
    %1341 = vmatpush1.bf16.msra.mxu0 0
    %1342 = vmatprep.subr.bf16.mxu0 0
    %1343 = vmatpush1.bf16.msra.mxu0 0
    %1344 = vmatprep.subr.bf16.mxu0 0
    %1345 = vmatpush1.bf16.msra.mxu0 0
    %1346 = vmatprep.subr.bf16.mxu0 0
    %1347 = vmatpush1.bf16.msra.mxu0 0
    %1348 = vmatprep.subr.bf16.mxu0 0
    %1349 = vmatpush1.bf16.msra.mxu0 0
    %1350 = vmatprep.subr.bf16.mxu0 0
    %1351 = vmatpush1.bf16.msra.mxu0 0
    %1352 = vmatprep.subr.bf16.mxu0 0
    %1353 = vmatpush1.bf16.msra.mxu0 0
    %1354 = vmatprep.mubr.bf16.mxu0 0
    %1355 = vmatmul.mubr.bf16.gmra.mrb[0].mxu0 %v1279
    %v1356 = vpop.f32.mrb[0].mxu0
    %v1357 = vadd.f32 %v1129, %v1356
    %v1358 = vpop.f32.mrb[0].mxu0
    %v1359 = vadd.f32 %v1133, %v1358
    %v1360 = vpop.f32.mrb[0].mxu0
    %v1361 = vpop.f32.mrb[0].mxu0
    %1362 = vdwg.mxu0
    %1363 = vmatprep.subr.bf16.mxu0 %v863
    %1364 = vmatpush1.bf16.msra.mxu0 %v862
    %1365 = vmatprep.subr.bf16.mxu0 %v895
    %1366 = vmatpush1.bf16.msra.mxu0 %v894
    %1367 = vmatprep.subr.bf16.mxu0 %v927
    %1368 = vmatpush1.bf16.msra.mxu0 %v926
    %1369 = vmatprep.subr.bf16.mxu0 %v959
    %1370 = vmatpush1.bf16.msra.mxu0 %v958
    %1371 = vmatprep.subr.bf16.mxu0 0
    %1372 = vmatpush1.bf16.msra.mxu0 0
    %1373 = vmatprep.subr.bf16.mxu0 0
    %1374 = vmatpush1.bf16.msra.mxu0 0
    %1375 = vmatprep.subr.bf16.mxu0 0
    %1376 = vmatpush1.bf16.msra.mxu0 0
    %1377 = vmatprep.subr.bf16.mxu0 0
    %1378 = vmatpush1.bf16.msra.mxu0 0
    %1379 = vmatprep.subr.bf16.mxu0 0
    %1380 = vmatpush1.bf16.msra.mxu0 0
    %1381 = vmatprep.subr.bf16.mxu0 0
    %1382 = vmatpush1.bf16.msra.mxu0 0
    %1383 = vmatprep.subr.bf16.mxu0 0
    %1384 = vmatpush1.bf16.msra.mxu0 0
    %1385 = vmatprep.subr.bf16.mxu0 0
    %1386 = vmatpush1.bf16.msra.mxu0 0
    %1387 = vmatprep.subr.bf16.mxu0 0
    %1388 = vmatpush1.bf16.msra.mxu0 0
    %1389 = vmatprep.subr.bf16.mxu0 0
    %1390 = vmatpush1.bf16.msra.mxu0 0
    %1391 = vmatprep.subr.bf16.mxu0 0
    %1392 = vmatpush1.bf16.msra.mxu0 0
    %1393 = vmatprep.subr.bf16.mxu0 0
    %1394 = vmatpush1.bf16.msra.mxu0 0
    %1395 = vmatprep.mubr.bf16.mxu0 0
    %1396 = vmatmul.mubr.bf16.gmra.mrb[0].mxu0 %v1279
    %v1397 = vpop.f32.mrb[0].mxu0
    %v1398 = vadd.f32 %v1137, %v1397
    %v1399 = vpop.f32.mrb[0].mxu0
    %v1400 = vadd.f32 %v1141, %v1399
    %v1401 = vpop.f32.mrb[0].mxu0
    %v1402 = vpop.f32.mrb[0].mxu0
    %1403 = vdwg.mxu0
    %1404 = vmatprep.subr.bf16.mxu0 %v865
    %1405 = vmatpush1.bf16.msra.mxu0 %v864
    %1406 = vmatprep.subr.bf16.mxu0 %v897
    %1407 = vmatpush1.bf16.msra.mxu0 %v896
    %1408 = vmatprep.subr.bf16.mxu0 %v929
    %1409 = vmatpush1.bf16.msra.mxu0 %v928
    %1410 = vmatprep.subr.bf16.mxu0 %v961
    %1411 = vmatpush1.bf16.msra.mxu0 %v960
    %1412 = vmatprep.subr.bf16.mxu0 0
    %1413 = vmatpush1.bf16.msra.mxu0 0
    %1414 = vmatprep.subr.bf16.mxu0 0
    %1415 = vmatpush1.bf16.msra.mxu0 0
    %1416 = vmatprep.subr.bf16.mxu0 0
    %1417 = vmatpush1.bf16.msra.mxu0 0
    %1418 = vmatprep.subr.bf16.mxu0 0
    %1419 = vmatpush1.bf16.msra.mxu0 0
    %1420 = vmatprep.subr.bf16.mxu0 0
    %1421 = vmatpush1.bf16.msra.mxu0 0
    %1422 = vmatprep.subr.bf16.mxu0 0
    %1423 = vmatpush1.bf16.msra.mxu0 0
    %1424 = vmatprep.subr.bf16.mxu0 0
    %1425 = vmatpush1.bf16.msra.mxu0 0
    %1426 = vmatprep.subr.bf16.mxu0 0
    %1427 = vmatpush1.bf16.msra.mxu0 0
    %1428 = vmatprep.subr.bf16.mxu0 0
    %1429 = vmatpush1.bf16.msra.mxu0 0
    %1430 = vmatprep.subr.bf16.mxu0 0
    %1431 = vmatpush1.bf16.msra.mxu0 0
    %1432 = vmatprep.subr.bf16.mxu0 0
    %1433 = vmatpush1.bf16.msra.mxu0 0
    %1434 = vmatprep.subr.bf16.mxu0 0
    %1435 = vmatpush1.bf16.msra.mxu0 0
    %1436 = vmatprep.mubr.bf16.mxu0 0
    %1437 = vmatmul.mubr.bf16.gmra.mrb[0].mxu0 %v1279
    %v1438 = vpop.f32.mrb[0].mxu0
    %v1439 = vadd.f32 %v1145, %v1438
    %v1440 = vpop.f32.mrb[0].mxu0
    %v1441 = vadd.f32 %v1149, %v1440
    %v1442 = vpop.f32.mrb[0].mxu0
    %v1443 = vpop.f32.mrb[0].mxu0
    %1444 = vdwg.mxu0
    %1445 = vmatprep.subr.bf16.mxu0 %v867
    %1446 = vmatpush1.bf16.msra.mxu0 %v866
    %1447 = vmatprep.subr.bf16.mxu0 %v899
    %1448 = vmatpush1.bf16.msra.mxu0 %v898
    %1449 = vmatprep.subr.bf16.mxu0 %v931
    %1450 = vmatpush1.bf16.msra.mxu0 %v930
    %1451 = vmatprep.subr.bf16.mxu0 %v963
    %1452 = vmatpush1.bf16.msra.mxu0 %v962
    %1453 = vmatprep.subr.bf16.mxu0 0
    %1454 = vmatpush1.bf16.msra.mxu0 0
    %1455 = vmatprep.subr.bf16.mxu0 0
    %1456 = vmatpush1.bf16.msra.mxu0 0
    %1457 = vmatprep.subr.bf16.mxu0 0
    %1458 = vmatpush1.bf16.msra.mxu0 0
    %1459 = vmatprep.subr.bf16.mxu0 0
    %1460 = vmatpush1.bf16.msra.mxu0 0
    %1461 = vmatprep.subr.bf16.mxu0 0
    %1462 = vmatpush1.bf16.msra.mxu0 0
    %1463 = vmatprep.subr.bf16.mxu0 0
    %1464 = vmatpush1.bf16.msra.mxu0 0
    %1465 = vmatprep.subr.bf16.mxu0 0
    %1466 = vmatpush1.bf16.msra.mxu0 0
    %1467 = vmatprep.subr.bf16.mxu0 0
    %1468 = vmatpush1.bf16.msra.mxu0 0
    %1469 = vmatprep.subr.bf16.mxu0 0
    %1470 = vmatpush1.bf16.msra.mxu0 0
    %1471 = vmatprep.subr.bf16.mxu0 0
    %1472 = vmatpush1.bf16.msra.mxu0 0
    %1473 = vmatprep.subr.bf16.mxu0 0
    %1474 = vmatpush1.bf16.msra.mxu0 0
    %1475 = vmatprep.subr.bf16.mxu0 0
    %1476 = vmatpush1.bf16.msra.mxu0 0
    %1477 = vmatprep.mubr.bf16.mxu0 0
    %1478 = vmatmul.mubr.bf16.gmra.mrb[0].mxu0 %v1279
    %v1479 = vpop.f32.mrb[0].mxu0
    %v1480 = vadd.f32 %v1153, %v1479
    %v1481 = vpop.f32.mrb[0].mxu0
    %v1482 = vadd.f32 %v1157, %v1481
    %v1483 = vpop.f32.mrb[0].mxu0
    %v1484 = vpop.f32.mrb[0].mxu0
    %1485 = vdwg.mxu0
    %1486 = vmatprep.subr.bf16.mxu0 %v869
    %1487 = vmatpush1.bf16.msra.mxu0 %v868
    %1488 = vmatprep.subr.bf16.mxu0 %v901
    %1489 = vmatpush1.bf16.msra.mxu0 %v900
    %1490 = vmatprep.subr.bf16.mxu0 %v933
    %1491 = vmatpush1.bf16.msra.mxu0 %v932
    %1492 = vmatprep.subr.bf16.mxu0 %v965
    %1493 = vmatpush1.bf16.msra.mxu0 %v964
    %1494 = vmatprep.subr.bf16.mxu0 0
    %1495 = vmatpush1.bf16.msra.mxu0 0
    %1496 = vmatprep.subr.bf16.mxu0 0
    %1497 = vmatpush1.bf16.msra.mxu0 0
    %1498 = vmatprep.subr.bf16.mxu0 0
    %1499 = vmatpush1.bf16.msra.mxu0 0
    %1500 = vmatprep.subr.bf16.mxu0 0
    %1501 = vmatpush1.bf16.msra.mxu0 0
    %1502 = vmatprep.subr.bf16.mxu0 0
    %1503 = vmatpush1.bf16.msra.mxu0 0
    %1504 = vmatprep.subr.bf16.mxu0 0
    %1505 = vmatpush1.bf16.msra.mxu0 0
    %1506 = vmatprep.subr.bf16.mxu0 0
    %1507 = vmatpush1.bf16.msra.mxu0 0
    %1508 = vmatprep.subr.bf16.mxu0 0
    %1509 = vmatpush1.bf16.msra.mxu0 0
    %1510 = vmatprep.subr.bf16.mxu0 0
    %1511 = vmatpush1.bf16.msra.mxu0 0
    %1512 = vmatprep.subr.bf16.mxu0 0
    %1513 = vmatpush1.bf16.msra.mxu0 0
    %1514 = vmatprep.subr.bf16.mxu0 0
    %1515 = vmatpush1.bf16.msra.mxu0 0
    %1516 = vmatprep.subr.bf16.mxu0 0
    %1517 = vmatpush1.bf16.msra.mxu0 0
    %1518 = vmatprep.mubr.bf16.mxu0 0
    %1519 = vmatmul.mubr.bf16.gmra.mrb[0].mxu0 %v1279
    %v1520 = vpop.f32.mrb[0].mxu0
    %v1521 = vadd.f32 %v1161, %v1520
    %v1522 = vpop.f32.mrb[0].mxu0
    %v1523 = vadd.f32 %v1165, %v1522
    %v1524 = vpop.f32.mrb[0].mxu0
    %v1525 = vpop.f32.mrb[0].mxu0
    %1526 = vdwg.mxu0
    %1527 = vmatprep.subr.bf16.mxu0 %v871
    %1528 = vmatpush1.bf16.msra.mxu0 %v870
    %1529 = vmatprep.subr.bf16.mxu0 %v903
    %1530 = vmatpush1.bf16.msra.mxu0 %v902
    %1531 = vmatprep.subr.bf16.mxu0 %v935
    %1532 = vmatpush1.bf16.msra.mxu0 %v934
    %1533 = vmatprep.subr.bf16.mxu0 %v967
    %1534 = vmatpush1.bf16.msra.mxu0 %v966
    %1535 = vmatprep.subr.bf16.mxu0 0
    %1536 = vmatpush1.bf16.msra.mxu0 0
    %1537 = vmatprep.subr.bf16.mxu0 0
    %1538 = vmatpush1.bf16.msra.mxu0 0
    %1539 = vmatprep.subr.bf16.mxu0 0
    %1540 = vmatpush1.bf16.msra.mxu0 0
    %1541 = vmatprep.subr.bf16.mxu0 0
    %1542 = vmatpush1.bf16.msra.mxu0 0
    %1543 = vmatprep.subr.bf16.mxu0 0
    %1544 = vmatpush1.bf16.msra.mxu0 0
    %1545 = vmatprep.subr.bf16.mxu0 0
    %1546 = vmatpush1.bf16.msra.mxu0 0
    %1547 = vmatprep.subr.bf16.mxu0 0
    %1548 = vmatpush1.bf16.msra.mxu0 0
    %1549 = vmatprep.subr.bf16.mxu0 0
    %1550 = vmatpush1.bf16.msra.mxu0 0
    %1551 = vmatprep.subr.bf16.mxu0 0
    %1552 = vmatpush1.bf16.msra.mxu0 0
    %1553 = vmatprep.subr.bf16.mxu0 0
    %1554 = vmatpush1.bf16.msra.mxu0 0
    %1555 = vmatprep.subr.bf16.mxu0 0
    %1556 = vmatpush1.bf16.msra.mxu0 0
    %1557 = vmatprep.subr.bf16.mxu0 0
    %1558 = vmatpush1.bf16.msra.mxu0 0
    %1559 = vmatprep.mubr.bf16.mxu0 0
    %1560 = vmatmul.mubr.bf16.gmra.mrb[0].mxu0 %v1279
    %v1561 = vpop.f32.mrb[0].mxu0
    %v1562 = vadd.f32 %v1169, %v1561
    %v1563 = vpop.f32.mrb[0].mxu0
    %v1564 = vadd.f32 %v1173, %v1563
    %v1565 = vpop.f32.mrb[0].mxu0
    %v1566 = vpop.f32.mrb[0].mxu0
    %1567 = vdwg.mxu0
    %1568 = vmatprep.subr.bf16.mxu0 %v873
    %1569 = vmatpush1.bf16.msra.mxu0 %v872
    %1570 = vmatprep.subr.bf16.mxu0 %v905
    %1571 = vmatpush1.bf16.msra.mxu0 %v904
    %1572 = vmatprep.subr.bf16.mxu0 %v937
    %1573 = vmatpush1.bf16.msra.mxu0 %v936
    %1574 = vmatprep.subr.bf16.mxu0 %v969
    %1575 = vmatpush1.bf16.msra.mxu0 %v968
    %1576 = vmatprep.subr.bf16.mxu0 0
    %1577 = vmatpush1.bf16.msra.mxu0 0
    %1578 = vmatprep.subr.bf16.mxu0 0
    %1579 = vmatpush1.bf16.msra.mxu0 0
    %1580 = vmatprep.subr.bf16.mxu0 0
    %1581 = vmatpush1.bf16.msra.mxu0 0
    %1582 = vmatprep.subr.bf16.mxu0 0
    %1583 = vmatpush1.bf16.msra.mxu0 0
    %1584 = vmatprep.subr.bf16.mxu0 0
    %1585 = vmatpush1.bf16.msra.mxu0 0
    %1586 = vmatprep.subr.bf16.mxu0 0
    %1587 = vmatpush1.bf16.msra.mxu0 0
    %1588 = vmatprep.subr.bf16.mxu0 0
    %1589 = vmatpush1.bf16.msra.mxu0 0
    %1590 = vmatprep.subr.bf16.mxu0 0
    %1591 = vmatpush1.bf16.msra.mxu0 0
    %1592 = vmatprep.subr.bf16.mxu0 0
    %1593 = vmatpush1.bf16.msra.mxu0 0
    %1594 = vmatprep.subr.bf16.mxu0 0
    %1595 = vmatpush1.bf16.msra.mxu0 0
    %1596 = vmatprep.subr.bf16.mxu0 0
    %1597 = vmatpush1.bf16.msra.mxu0 0
    %1598 = vmatprep.subr.bf16.mxu0 0
    %1599 = vmatpush1.bf16.msra.mxu0 0
    %1600 = vmatprep.mubr.bf16.mxu0 0
    %1601 = vmatmul.mubr.bf16.gmra.mrb[0].mxu0 %v1279
    %v1602 = vpop.f32.mrb[0].mxu0
    %v1603 = vadd.f32 %v1177, %v1602
    %v1604 = vpop.f32.mrb[0].mxu0
    %v1605 = vadd.f32 %v1181, %v1604
    %v1606 = vpop.f32.mrb[0].mxu0
    %v1607 = vpop.f32.mrb[0].mxu0
    %1608 = vdwg.mxu0
    %1609 = vmatprep.subr.bf16.mxu0 %v875
    %1610 = vmatpush1.bf16.msra.mxu0 %v874
    %1611 = vmatprep.subr.bf16.mxu0 %v907
    %1612 = vmatpush1.bf16.msra.mxu0 %v906
    %1613 = vmatprep.subr.bf16.mxu0 %v939
    %1614 = vmatpush1.bf16.msra.mxu0 %v938
    %1615 = vmatprep.subr.bf16.mxu0 %v971
    %1616 = vmatpush1.bf16.msra.mxu0 %v970
    %1617 = vmatprep.subr.bf16.mxu0 0
    %1618 = vmatpush1.bf16.msra.mxu0 0
    %1619 = vmatprep.subr.bf16.mxu0 0
    %1620 = vmatpush1.bf16.msra.mxu0 0
    %1621 = vmatprep.subr.bf16.mxu0 0
    %1622 = vmatpush1.bf16.msra.mxu0 0
    %1623 = vmatprep.subr.bf16.mxu0 0
    %1624 = vmatpush1.bf16.msra.mxu0 0
    %1625 = vmatprep.subr.bf16.mxu0 0
    %1626 = vmatpush1.bf16.msra.mxu0 0
    %1627 = vmatprep.subr.bf16.mxu0 0
    %1628 = vmatpush1.bf16.msra.mxu0 0
    %1629 = vmatprep.subr.bf16.mxu0 0
    %1630 = vmatpush1.bf16.msra.mxu0 0
    %1631 = vmatprep.subr.bf16.mxu0 0
    %1632 = vmatpush1.bf16.msra.mxu0 0
    %1633 = vmatprep.subr.bf16.mxu0 0
    %1634 = vmatpush1.bf16.msra.mxu0 0
    %1635 = vmatprep.subr.bf16.mxu0 0
    %1636 = vmatpush1.bf16.msra.mxu0 0
    %1637 = vmatprep.subr.bf16.mxu0 0
    %1638 = vmatpush1.bf16.msra.mxu0 0
    %1639 = vmatprep.subr.bf16.mxu0 0
    %1640 = vmatpush1.bf16.msra.mxu0 0
    %1641 = vmatprep.mubr.bf16.mxu0 0
    %1642 = vmatmul.mubr.bf16.gmra.mrb[0].mxu0 %v1279
    %v1643 = vpop.f32.mrb[0].mxu0
    %v1644 = vadd.f32 %v1185, %v1643
    %v1645 = vpop.f32.mrb[0].mxu0
    %v1646 = vadd.f32 %v1189, %v1645
    %v1647 = vpop.f32.mrb[0].mxu0
    %v1648 = vpop.f32.mrb[0].mxu0
    %1649 = vdwg.mxu0
    %1650 = vmatprep.subr.bf16.mxu0 %v877
    %1651 = vmatpush1.bf16.msra.mxu0 %v876
    %1652 = vmatprep.subr.bf16.mxu0 %v909
    %1653 = vmatpush1.bf16.msra.mxu0 %v908
    %1654 = vmatprep.subr.bf16.mxu0 %v941
    %1655 = vmatpush1.bf16.msra.mxu0 %v940
    %1656 = vmatprep.subr.bf16.mxu0 %v973
    %1657 = vmatpush1.bf16.msra.mxu0 %v972
    %1658 = vmatprep.subr.bf16.mxu0 0
    %1659 = vmatpush1.bf16.msra.mxu0 0
    %1660 = vmatprep.subr.bf16.mxu0 0
    %1661 = vmatpush1.bf16.msra.mxu0 0
    %1662 = vmatprep.subr.bf16.mxu0 0
    %1663 = vmatpush1.bf16.msra.mxu0 0
    %1664 = vmatprep.subr.bf16.mxu0 0
    %1665 = vmatpush1.bf16.msra.mxu0 0
    %1666 = vmatprep.subr.bf16.mxu0 0
    %1667 = vmatpush1.bf16.msra.mxu0 0
    %1668 = vmatprep.subr.bf16.mxu0 0
    %1669 = vmatpush1.bf16.msra.mxu0 0
    %1670 = vmatprep.subr.bf16.mxu0 0
    %1671 = vmatpush1.bf16.msra.mxu0 0
    %1672 = vmatprep.subr.bf16.mxu0 0
    %1673 = vmatpush1.bf16.msra.mxu0 0
    %1674 = vmatprep.subr.bf16.mxu0 0
    %1675 = vmatpush1.bf16.msra.mxu0 0
    %1676 = vmatprep.subr.bf16.mxu0 0
    %1677 = vmatpush1.bf16.msra.mxu0 0
    %1678 = vmatprep.subr.bf16.mxu0 0
    %1679 = vmatpush1.bf16.msra.mxu0 0
    %1680 = vmatprep.subr.bf16.mxu0 0
    %1681 = vmatpush1.bf16.msra.mxu0 0
    %1682 = vmatprep.mubr.bf16.mxu0 0
    %1683 = vmatmul.mubr.bf16.gmra.mrb[0].mxu0 %v1279
    %v1684 = vpop.f32.mrb[0].mxu0
    %v1685 = vadd.f32 %v1193, %v1684
    %v1686 = vpop.f32.mrb[0].mxu0
    %v1687 = vadd.f32 %v1197, %v1686
    %v1688 = vpop.f32.mrb[0].mxu0
    %v1689 = vpop.f32.mrb[0].mxu0
    %1690 = vdwg.mxu0
    %1691 = vmatprep.subr.bf16.mxu0 %v879
    %1692 = vmatpush1.bf16.msra.mxu0 %v878
    %1693 = vmatprep.subr.bf16.mxu0 %v911
    %1694 = vmatpush1.bf16.msra.mxu0 %v910
    %1695 = vmatprep.subr.bf16.mxu0 %v943
    %1696 = vmatpush1.bf16.msra.mxu0 %v942
    %1697 = vmatprep.subr.bf16.mxu0 %v975
    %1698 = vmatpush1.bf16.msra.mxu0 %v974
    %1699 = vmatprep.subr.bf16.mxu0 0
    %1700 = vmatpush1.bf16.msra.mxu0 0
    %1701 = vmatprep.subr.bf16.mxu0 0
    %1702 = vmatpush1.bf16.msra.mxu0 0
    %1703 = vmatprep.subr.bf16.mxu0 0
    %1704 = vmatpush1.bf16.msra.mxu0 0
    %1705 = vmatprep.subr.bf16.mxu0 0
    %1706 = vmatpush1.bf16.msra.mxu0 0
    %1707 = vmatprep.subr.bf16.mxu0 0
    %1708 = vmatpush1.bf16.msra.mxu0 0
    %1709 = vmatprep.subr.bf16.mxu0 0
    %1710 = vmatpush1.bf16.msra.mxu0 0
    %1711 = vmatprep.subr.bf16.mxu0 0
    %1712 = vmatpush1.bf16.msra.mxu0 0
    %1713 = vmatprep.subr.bf16.mxu0 0
    %1714 = vmatpush1.bf16.msra.mxu0 0
    %1715 = vmatprep.subr.bf16.mxu0 0
    %1716 = vmatpush1.bf16.msra.mxu0 0
    %1717 = vmatprep.subr.bf16.mxu0 0
    %1718 = vmatpush1.bf16.msra.mxu0 0
    %1719 = vmatprep.subr.bf16.mxu0 0
    %1720 = vmatpush1.bf16.msra.mxu0 0
    %1721 = vmatprep.subr.bf16.mxu0 0
    %1722 = vmatpush1.bf16.msra.mxu0 0
    %1723 = vmatprep.mubr.bf16.mxu0 0
    %1724 = vmatmul.mubr.bf16.gmra.mrb[0].mxu0 %v1279
    %v1725 = vpop.f32.mrb[0].mxu0
    %v1726 = vadd.f32 %v1201, %v1725
    %v1727 = vpop.f32.mrb[0].mxu0
    %v1728 = vadd.f32 %v1205, %v1727
    %v1729 = vpop.f32.mrb[0].mxu0
    %v1730 = vpop.f32.mrb[0].mxu0
    %1731 = vdwg.mxu0
    %1732 = vmatprep.subr.bf16.mxu0 %v881
    %1733 = vmatpush1.bf16.msra.mxu0 %v880
    %1734 = vmatprep.subr.bf16.mxu0 %v913
    %1735 = vmatpush1.bf16.msra.mxu0 %v912
    %1736 = vmatprep.subr.bf16.mxu0 %v945
    %1737 = vmatpush1.bf16.msra.mxu0 %v944
    %1738 = vmatprep.subr.bf16.mxu0 %v977
    %1739 = vmatpush1.bf16.msra.mxu0 %v976
    %1740 = vmatprep.subr.bf16.mxu0 0
    %1741 = vmatpush1.bf16.msra.mxu0 0
    %1742 = vmatprep.subr.bf16.mxu0 0
    %1743 = vmatpush1.bf16.msra.mxu0 0
    %1744 = vmatprep.subr.bf16.mxu0 0
    %1745 = vmatpush1.bf16.msra.mxu0 0
    %1746 = vmatprep.subr.bf16.mxu0 0
    %1747 = vmatpush1.bf16.msra.mxu0 0
    %1748 = vmatprep.subr.bf16.mxu0 0
    %1749 = vmatpush1.bf16.msra.mxu0 0
    %1750 = vmatprep.subr.bf16.mxu0 0
    %1751 = vmatpush1.bf16.msra.mxu0 0
    %1752 = vmatprep.subr.bf16.mxu0 0
    %1753 = vmatpush1.bf16.msra.mxu0 0
    %1754 = vmatprep.subr.bf16.mxu0 0
    %1755 = vmatpush1.bf16.msra.mxu0 0
    %1756 = vmatprep.subr.bf16.mxu0 0
    %1757 = vmatpush1.bf16.msra.mxu0 0
    %1758 = vmatprep.subr.bf16.mxu0 0
    %1759 = vmatpush1.bf16.msra.mxu0 0
    %1760 = vmatprep.subr.bf16.mxu0 0
    %1761 = vmatpush1.bf16.msra.mxu0 0
    %1762 = vmatprep.subr.bf16.mxu0 0
    %1763 = vmatpush1.bf16.msra.mxu0 0
    %1764 = vmatprep.mubr.bf16.mxu0 0
    %1765 = vmatmul.mubr.bf16.gmra.mrb[0].mxu0 %v1279
    %v1766 = vpop.f32.mrb[0].mxu0
    %v1767 = vadd.f32 %v1209, %v1766
    %v1768 = vpop.f32.mrb[0].mxu0
    %v1769 = vadd.f32 %v1213, %v1768
    %v1770 = vpop.f32.mrb[0].mxu0
    %v1771 = vpop.f32.mrb[0].mxu0
    %1772 = vdwg.mxu0
    %1773 = vmatprep.subr.bf16.mxu0 %v883
    %1774 = vmatpush1.bf16.msra.mxu0 %v882
    %1775 = vmatprep.subr.bf16.mxu0 %v915
    %1776 = vmatpush1.bf16.msra.mxu0 %v914
    %1777 = vmatprep.subr.bf16.mxu0 %v947
    %1778 = vmatpush1.bf16.msra.mxu0 %v946
    %1779 = vmatprep.subr.bf16.mxu0 %v979
    %1780 = vmatpush1.bf16.msra.mxu0 %v978
    %1781 = vmatprep.subr.bf16.mxu0 0
    %1782 = vmatpush1.bf16.msra.mxu0 0
    %1783 = vmatprep.subr.bf16.mxu0 0
    %1784 = vmatpush1.bf16.msra.mxu0 0
    %1785 = vmatprep.subr.bf16.mxu0 0
    %1786 = vmatpush1.bf16.msra.mxu0 0
    %1787 = vmatprep.subr.bf16.mxu0 0
    %1788 = vmatpush1.bf16.msra.mxu0 0
    %1789 = vmatprep.subr.bf16.mxu0 0
    %1790 = vmatpush1.bf16.msra.mxu0 0
    %1791 = vmatprep.subr.bf16.mxu0 0
    %1792 = vmatpush1.bf16.msra.mxu0 0
    %1793 = vmatprep.subr.bf16.mxu0 0
    %1794 = vmatpush1.bf16.msra.mxu0 0
    %1795 = vmatprep.subr.bf16.mxu0 0
    %1796 = vmatpush1.bf16.msra.mxu0 0
    %1797 = vmatprep.subr.bf16.mxu0 0
    %1798 = vmatpush1.bf16.msra.mxu0 0
    %1799 = vmatprep.subr.bf16.mxu0 0
    %1800 = vmatpush1.bf16.msra.mxu0 0
    %1801 = vmatprep.subr.bf16.mxu0 0
    %1802 = vmatpush1.bf16.msra.mxu0 0
    %1803 = vmatprep.subr.bf16.mxu0 0
    %1804 = vmatpush1.bf16.msra.mxu0 0
    %1805 = vmatprep.mubr.bf16.mxu0 0
    %1806 = vmatmul.mubr.bf16.gmra.mrb[0].mxu0 %v1279
    %v1807 = vpop.f32.mrb[0].mxu0
    %v1808 = vadd.f32 %v1217, %v1807
    %v1809 = vpop.f32.mrb[0].mxu0
    %v1810 = vadd.f32 %v1221, %v1809
    %v1811 = vpop.f32.mrb[0].mxu0
    %v1812 = vpop.f32.mrb[0].mxu0
    %1813 = vdwg.mxu0
    %1814 = vmatprep.subr.bf16.mxu0 %v885
    %1815 = vmatpush1.bf16.msra.mxu0 %v884
    %1816 = vmatprep.subr.bf16.mxu0 %v917
    %1817 = vmatpush1.bf16.msra.mxu0 %v916
    %1818 = vmatprep.subr.bf16.mxu0 %v949
    %1819 = vmatpush1.bf16.msra.mxu0 %v948
    %1820 = vmatprep.subr.bf16.mxu0 %v981
    %1821 = vmatpush1.bf16.msra.mxu0 %v980
    %1822 = vmatprep.subr.bf16.mxu0 0
    %1823 = vmatpush1.bf16.msra.mxu0 0
    %1824 = vmatprep.subr.bf16.mxu0 0
    %1825 = vmatpush1.bf16.msra.mxu0 0
    %1826 = vmatprep.subr.bf16.mxu0 0
    %1827 = vmatpush1.bf16.msra.mxu0 0
    %1828 = vmatprep.subr.bf16.mxu0 0
    %1829 = vmatpush1.bf16.msra.mxu0 0
    %1830 = vmatprep.subr.bf16.mxu0 0
    %1831 = vmatpush1.bf16.msra.mxu0 0
    %1832 = vmatprep.subr.bf16.mxu0 0
    %1833 = vmatpush1.bf16.msra.mxu0 0
    %1834 = vmatprep.subr.bf16.mxu0 0
    %1835 = vmatpush1.bf16.msra.mxu0 0
    %1836 = vmatprep.subr.bf16.mxu0 0
    %1837 = vmatpush1.bf16.msra.mxu0 0
    %1838 = vmatprep.subr.bf16.mxu0 0
    %1839 = vmatpush1.bf16.msra.mxu0 0
    %1840 = vmatprep.subr.bf16.mxu0 0
    %1841 = vmatpush1.bf16.msra.mxu0 0
    %1842 = vmatprep.subr.bf16.mxu0 0
    %1843 = vmatpush1.bf16.msra.mxu0 0
    %1844 = vmatprep.subr.bf16.mxu0 0
    %1845 = vmatpush1.bf16.msra.mxu0 0
    %1846 = vmatprep.mubr.bf16.mxu0 0
    %1847 = vmatmul.mubr.bf16.gmra.mrb[0].mxu0 %v1279
    %v1848 = vpop.f32.mrb[0].mxu0
    %v1849 = vadd.f32 %v1225, %v1848
    %v1850 = vpop.f32.mrb[0].mxu0
    %v1851 = vadd.f32 %v1229, %v1850
    %v1852 = vpop.f32.mrb[0].mxu0
    %v1853 = vpop.f32.mrb[0].mxu0
    %1854 = vdwg.mxu0
    %1855 = vmatprep.subr.bf16.mxu0 %v887
    %1856 = vmatpush1.bf16.msra.mxu0 %v886
    %1857 = vmatprep.subr.bf16.mxu0 %v919
    %1858 = vmatpush1.bf16.msra.mxu0 %v918
    %1859 = vmatprep.subr.bf16.mxu0 %v951
    %1860 = vmatpush1.bf16.msra.mxu0 %v950
    %1861 = vmatprep.subr.bf16.mxu0 %v983
    %1862 = vmatpush1.bf16.msra.mxu0 %v982
    %1863 = vmatprep.subr.bf16.mxu0 0
    %1864 = vmatpush1.bf16.msra.mxu0 0
    %1865 = vmatprep.subr.bf16.mxu0 0
    %1866 = vmatpush1.bf16.msra.mxu0 0
    %1867 = vmatprep.subr.bf16.mxu0 0
    %1868 = vmatpush1.bf16.msra.mxu0 0
    %1869 = vmatprep.subr.bf16.mxu0 0
    %1870 = vmatpush1.bf16.msra.mxu0 0
    %1871 = vmatprep.subr.bf16.mxu0 0
    %1872 = vmatpush1.bf16.msra.mxu0 0
    %1873 = vmatprep.subr.bf16.mxu0 0
    %1874 = vmatpush1.bf16.msra.mxu0 0
    %1875 = vmatprep.subr.bf16.mxu0 0
    %1876 = vmatpush1.bf16.msra.mxu0 0
    %1877 = vmatprep.subr.bf16.mxu0 0
    %1878 = vmatpush1.bf16.msra.mxu0 0
    %1879 = vmatprep.subr.bf16.mxu0 0
    %1880 = vmatpush1.bf16.msra.mxu0 0
    %1881 = vmatprep.subr.bf16.mxu0 0
    %1882 = vmatpush1.bf16.msra.mxu0 0
    %1883 = vmatprep.subr.bf16.mxu0 0
    %1884 = vmatpush1.bf16.msra.mxu0 0
    %1885 = vmatprep.subr.bf16.mxu0 0
    %1886 = vmatpush1.bf16.msra.mxu0 0
    %1887 = vmatprep.mubr.bf16.mxu0 0
    %1888 = vmatmul.mubr.bf16.gmra.mrb[0].mxu0 %v1279
    %v1889 = vpop.f32.mrb[0].mxu0
    %v1890 = vadd.f32 %v1233, %v1889
    %v1891 = vpop.f32.mrb[0].mxu0
    %v1892 = vadd.f32 %v1237, %v1891
    %v1893 = vpop.f32.mrb[0].mxu0
    %v1894 = vpop.f32.mrb[0].mxu0
    %1895 = vdwg.mxu0
    %1896 = vmatprep.subr.bf16.mxu0 %v889
    %1897 = vmatpush1.bf16.msra.mxu0 %v888
    %1898 = vmatprep.subr.bf16.mxu0 %v921
    %1899 = vmatpush1.bf16.msra.mxu0 %v920
    %1900 = vmatprep.subr.bf16.mxu0 %v953
    %1901 = vmatpush1.bf16.msra.mxu0 %v952
    %1902 = vmatprep.subr.bf16.mxu0 %v985
    %1903 = vmatpush1.bf16.msra.mxu0 %v984
    %1904 = vmatprep.subr.bf16.mxu0 0
    %1905 = vmatpush1.bf16.msra.mxu0 0
    %1906 = vmatprep.subr.bf16.mxu0 0
    %1907 = vmatpush1.bf16.msra.mxu0 0
    %1908 = vmatprep.subr.bf16.mxu0 0
    %1909 = vmatpush1.bf16.msra.mxu0 0
    %1910 = vmatprep.subr.bf16.mxu0 0
    %1911 = vmatpush1.bf16.msra.mxu0 0
    %1912 = vmatprep.subr.bf16.mxu0 0
    %1913 = vmatpush1.bf16.msra.mxu0 0
    %1914 = vmatprep.subr.bf16.mxu0 0
    %1915 = vmatpush1.bf16.msra.mxu0 0
    %1916 = vmatprep.subr.bf16.mxu0 0
    %1917 = vmatpush1.bf16.msra.mxu0 0
    %1918 = vmatprep.subr.bf16.mxu0 0
    %1919 = vmatpush1.bf16.msra.mxu0 0
    %1920 = vmatprep.subr.bf16.mxu0 0
    %1921 = vmatpush1.bf16.msra.mxu0 0
    %1922 = vmatprep.subr.bf16.mxu0 0
    %1923 = vmatpush1.bf16.msra.mxu0 0
    %1924 = vmatprep.subr.bf16.mxu0 0
    %1925 = vmatpush1.bf16.msra.mxu0 0
    %1926 = vmatprep.subr.bf16.mxu0 0
    %1927 = vmatpush1.bf16.msra.mxu0 0
    %1928 = vmatprep.mubr.bf16.mxu0 0
    %1929 = vmatmul.mubr.bf16.gmra.mrb[0].mxu0 %v1279
    %v1930 = vpop.f32.mrb[0].mxu0
    %v1931 = vadd.f32 %v1241, %v1930
    %v1932 = vpop.f32.mrb[0].mxu0
    %v1933 = vadd.f32 %v1245, %v1932
    %v1934 = vpop.f32.mrb[0].mxu0
    %v1935 = vpop.f32.mrb[0].mxu0
    %1936 = vdwg.mxu0
    %v1969 = vcombine.low %v1316, %v1318
    %v1970 = vcombine.low %v1357, %v1359
    %v1971 = vcombine.low %v1398, %v1400
    %v1972 = vcombine.low %v1439, %v1441
    %v1974 = vunpack.c.l.s4 1966171168
    %v1975 = vunpack.c.0.s8 %v1974
    %v1976 = vlaneseq
    %v1977 = vshrl.u32 %v1976, 7
    %v1978 = vsub.s32 %v1975, %v1977
    %v1979 = vrot.slane %v1969, %v1978
    %v1981 = vunpack.c.l.s4 1966171168
    %v1982 = vunpack.c.0.s8 %v1981
    %v1983 = vlaneseq
    %v1984 = vshrl.u32 %v1983, 7
    %v1985 = vsub.s32 %v1982, %v1984
    %v1986 = vrot.slane %v1970, %v1985
    %v1988 = vunpack.c.l.s4 1966171168
    %v1989 = vunpack.c.0.s8 %v1988
    %v1990 = vlaneseq
    %v1991 = vshrl.u32 %v1990, 7
    %v1992 = vsub.s32 %v1989, %v1991
    %v1993 = vrot.slane %v1971, %v1992
    %v1995 = vunpack.c.l.s4 1966171168
    %v1996 = vunpack.c.0.s8 %v1995
    %v1997 = vlaneseq
    %v1998 = vshrl.u32 %v1997, 7
    %v1999 = vsub.s32 %v1996, %v1998
    %v2000 = vrot.slane %v1972, %v1999
    %v2001 = vcombine.low %v1979, %v1986
    %v2002 = vcombine.low %v1993, %v2000
    %v2004 = vunpack.c.l.s4 1966171168
    %v2005 = vunpack.c.0.s8 %v2004
    %v2006 = vlaneseq
    %v2007 = vshrl.u32 %v2006, 7
    %v2008 = vsub.s32 %v2005, %v2007
    %v2009 = vrot.slane %v2001, %v2008
    %v2011 = vunpack.c.l.s4 1966171168
    %v2012 = vunpack.c.0.s8 %v2011
    %v2013 = vlaneseq
    %v2014 = vshrl.u32 %v2013, 7
    %v2015 = vsub.s32 %v2012, %v2014
    %v2016 = vrot.slane %v2002, %v2015
    %v2017 = vcombine.low %v2009, %v2016
    %v2018 = vcombine.low %v1480, %v1482
    %v2019 = vcombine.low %v1521, %v1523
    %v2020 = vcombine.low %v1562, %v1564
    %v2021 = vcombine.low %v1603, %v1605
    %v2023 = vunpack.c.l.s4 1966171168
    %v2024 = vunpack.c.0.s8 %v2023
    %v2025 = vlaneseq
    %v2026 = vshrl.u32 %v2025, 7
    %v2027 = vsub.s32 %v2024, %v2026
    %v2028 = vrot.slane %v2018, %v2027
    %v2030 = vunpack.c.l.s4 1966171168
    %v2031 = vunpack.c.0.s8 %v2030
    %v2032 = vlaneseq
    %v2033 = vshrl.u32 %v2032, 7
    %v2034 = vsub.s32 %v2031, %v2033
    %v2035 = vrot.slane %v2019, %v2034
    %v2037 = vunpack.c.l.s4 1966171168
    %v2038 = vunpack.c.0.s8 %v2037
    %v2039 = vlaneseq
    %v2040 = vshrl.u32 %v2039, 7
    %v2041 = vsub.s32 %v2038, %v2040
    %v2042 = vrot.slane %v2020, %v2041
    %v2044 = vunpack.c.l.s4 1966171168
    %v2045 = vunpack.c.0.s8 %v2044
    %v2046 = vlaneseq
    %v2047 = vshrl.u32 %v2046, 7
    %v2048 = vsub.s32 %v2045, %v2047
    %v2049 = vrot.slane %v2021, %v2048
    %v2050 = vcombine.low %v2028, %v2035
    %v2051 = vcombine.low %v2042, %v2049
    %v2053 = vunpack.c.l.s4 1966171168
    %v2054 = vunpack.c.0.s8 %v2053
    %v2055 = vlaneseq
    %v2056 = vshrl.u32 %v2055, 7
    %v2057 = vsub.s32 %v2054, %v2056
    %v2058 = vrot.slane %v2050, %v2057
    %v2060 = vunpack.c.l.s4 1966171168
    %v2061 = vunpack.c.0.s8 %v2060
    %v2062 = vlaneseq
    %v2063 = vshrl.u32 %v2062, 7
    %v2064 = vsub.s32 %v2061, %v2063
    %v2065 = vrot.slane %v2051, %v2064
    %v2066 = vcombine.low %v2058, %v2065
    %v2067 = vcombine.low %v1644, %v1646
    %v2068 = vcombine.low %v1685, %v1687
    %v2069 = vcombine.low %v1726, %v1728
    %v2070 = vcombine.low %v1767, %v1769
    %v2072 = vunpack.c.l.s4 1966171168
    %v2073 = vunpack.c.0.s8 %v2072
    %v2074 = vlaneseq
    %v2075 = vshrl.u32 %v2074, 7
    %v2076 = vsub.s32 %v2073, %v2075
    %v2077 = vrot.slane %v2067, %v2076
    %v2079 = vunpack.c.l.s4 1966171168
    %v2080 = vunpack.c.0.s8 %v2079
    %v2081 = vlaneseq
    %v2082 = vshrl.u32 %v2081, 7
    %v2083 = vsub.s32 %v2080, %v2082
    %v2084 = vrot.slane %v2068, %v2083
    %v2086 = vunpack.c.l.s4 1966171168
    %v2087 = vunpack.c.0.s8 %v2086
    %v2088 = vlaneseq
    %v2089 = vshrl.u32 %v2088, 7
    %v2090 = vsub.s32 %v2087, %v2089
    %v2091 = vrot.slane %v2069, %v2090
    %v2093 = vunpack.c.l.s4 1966171168
    %v2094 = vunpack.c.0.s8 %v2093
    %v2095 = vlaneseq
    %v2096 = vshrl.u32 %v2095, 7
    %v2097 = vsub.s32 %v2094, %v2096
    %v2098 = vrot.slane %v2070, %v2097
    %v2099 = vcombine.low %v2077, %v2084
    %v2100 = vcombine.low %v2091, %v2098
    %v2102 = vunpack.c.l.s4 1966171168
    %v2103 = vunpack.c.0.s8 %v2102
    %v2104 = vlaneseq
    %v2105 = vshrl.u32 %v2104, 7
    %v2106 = vsub.s32 %v2103, %v2105
    %v2107 = vrot.slane %v2099, %v2106
    %v2109 = vunpack.c.l.s4 1966171168
    %v2110 = vunpack.c.0.s8 %v2109
    %v2111 = vlaneseq
    %v2112 = vshrl.u32 %v2111, 7
    %v2113 = vsub.s32 %v2110, %v2112
    %v2114 = vrot.slane %v2100, %v2113
    %v2115 = vcombine.low %v2107, %v2114
    %v2116 = vcombine.low %v1808, %v1810
    %v2117 = vcombine.low %v1849, %v1851
    %v2118 = vcombine.low %v1890, %v1892
    %v2119 = vcombine.low %v1931, %v1933
    %v2121 = vunpack.c.l.s4 1966171168
    %v2122 = vunpack.c.0.s8 %v2121
    %v2123 = vlaneseq
    %v2124 = vshrl.u32 %v2123, 7
    %v2125 = vsub.s32 %v2122, %v2124
    %v2126 = vrot.slane %v2116, %v2125
    %v2128 = vunpack.c.l.s4 1966171168
    %v2129 = vunpack.c.0.s8 %v2128
    %v2130 = vlaneseq
    %v2131 = vshrl.u32 %v2130, 7
    %v2132 = vsub.s32 %v2129, %v2131
    %v2133 = vrot.slane %v2117, %v2132
    %v2135 = vunpack.c.l.s4 1966171168
    %v2136 = vunpack.c.0.s8 %v2135
    %v2137 = vlaneseq
    %v2138 = vshrl.u32 %v2137, 7
    %v2139 = vsub.s32 %v2136, %v2138
    %v2140 = vrot.slane %v2118, %v2139
    %v2142 = vunpack.c.l.s4 1966171168
    %v2143 = vunpack.c.0.s8 %v2142
    %v2144 = vlaneseq
    %v2145 = vshrl.u32 %v2144, 7
    %v2146 = vsub.s32 %v2143, %v2145
    %v2147 = vrot.slane %v2119, %v2146
    %v2148 = vcombine.low %v2126, %v2133
    %v2149 = vcombine.low %v2140, %v2147
    %v2151 = vunpack.c.l.s4 1966171168
    %v2152 = vunpack.c.0.s8 %v2151
    %v2153 = vlaneseq
    %v2154 = vshrl.u32 %v2153, 7
    %v2155 = vsub.s32 %v2152, %v2154
    %v2156 = vrot.slane %v2148, %v2155
    %v2158 = vunpack.c.l.s4 1966171168
    %v2159 = vunpack.c.0.s8 %v2158
    %v2160 = vlaneseq
    %v2161 = vshrl.u32 %v2160, 7
    %v2162 = vsub.s32 %v2159, %v2161
    %v2163 = vrot.slane %v2149, %v2162
    %v2164 = vcombine.low %v2156, %v2163
    %2169 = vst [vmem:[#allocation5] sm:$0xff] %v2017
    %2170 = vst [vmem:[#allocation5 + $0x8] sm:$0xff] %v2066
    %2171 = vst [vmem:[#allocation5 + $0x10] sm:$0xff] %v2115
    %v2172 = vlaneseq
    %vm2173 = vcmp.ge.s32.totalorder %v2172, 0
    %vm2174 = vcmp.lt.s32.totalorder %v2172, 960
    %vm2175 = vmand %vm2173, %vm2174
    %2176 = vst.msk [vmem:[#allocation5 + $0x18] sm:$0xff] %vm2175, %v2164
    // Predicated region
    $region34: #{tpu_custom_call.1} parent=1 // pred_check
      _
    $region35: #{tpu_custom_call.1} parent=1 // pred_check_branch
      %2178 = sbr.rel (0) target = $region37
    $region36: #{tpu_custom_call.1} parent=1 // pred_region
      %s2180 = ssub.s32 512, 512
      %2181 = vsyncadd [#allocation4], %s2180
      %s2183 = sshll.u32 [#allocation5], 4
      %s2184 = int_to_ptr.vmem [resolvable:$true] %s2183
      %2186 = dma.vmem_to_hbm [thread:$0]  %s2184, 512, %s7, [#allocation4]
    $region37: #{tpu_custom_call.1} parent=1 // pred_fallthru
      _
    // Predicated region
    $region38: #{tpu_custom_call.1} parent=1 // pred_check
      _
    $region39: #{tpu_custom_call.1} parent=1 // pred_check_branch
      %2188 = sbr.rel (0) target = $region41
    $region40: #{tpu_custom_call.1} parent=1 // pred_region
      %2189 = dma.done [#allocation4], 512
    $region41: #{tpu_custom_call.1} parent=1 // pred_fallthru
      _
    %2190 = vsyncpa [#allocation3], 1
    %2191 = vsyncpa [#allocation4], 1

</llo_original>
